<compile_context>
chip_gen: v6e
topology: v6e:2x2x1
jax: 0.10.0
libtpu: 0.0.40
codegen_flags: <defaults>
</compile_context>

<pallas_src>
import functools

import jax
import jax.numpy as jnp
from jax.experimental import pallas as pl
from jax.experimental.pallas import tpu as pltpu


def _gru_kernel(x_ref,
                wih0_ref, whh0_ref, bi0_ref, bhn0_ref,
                wih1_ref, whh1_ref, bi1_ref, bhn1_ref,
                wlin_ref, blin_ref,
                out_ref, hid_ref,
                xproj_ref, h1all_ref,
                *, seq_len, batch, rnn_size, n_gaussian):
    H = rnn_size
    B = batch

    # ---- prologue: layer-0 input projection for ALL timesteps at once ----
    x_all = x_ref[...].astype(jnp.bfloat16)                       # (S*B, in)
    xproj_ref[...] = (
        jnp.dot(x_all, wih0_ref[...], preferred_element_type=jnp.float32)
        + bi0_ref[...])                                           # (S*B, 3H)

    # Hoist weights / biases out of the recurrence (broadcasts done once).
    whh0 = whh0_ref[...]                                          # (H, 3H) bf16
    wih1 = wih1_ref[...]                                          # (H, 3H) bf16
    whh1 = whh1_ref[...]                                          # (H, 3H) bf16
    bi1 = jnp.broadcast_to(bi1_ref[...], (B, 3 * H))              # f32
    bhn0 = jnp.broadcast_to(bhn0_ref[...], (B, H))                # f32
    bhn1 = jnp.broadcast_to(bhn1_ref[...], (B, H))                # f32

    def gru_cell(gi, h, whh, bhn):
        # gi = x@W_ih + combined bias, gates packed [r, z, n] along lanes.
        gh = jnp.dot(h.astype(jnp.bfloat16), whh,
                     preferred_element_type=jnp.float32)          # (B, 3H)
        r = jax.nn.sigmoid(gi[:, :H] + gh[:, :H])
        z = jax.nn.sigmoid(gi[:, H:2 * H] + gh[:, H:2 * H])
        n = jnp.tanh(gi[:, 2 * H:] + r * (gh[:, 2 * H:] + bhn))
        return (1.0 - z) * n + z * h

    def step(t, carry):
        h0, h1 = carry
        row = pl.multiple_of(t * B, B)
        gi0 = xproj_ref[pl.ds(row, B), :]                         # (B, 3H)
        h0 = gru_cell(gi0, h0, whh0, bhn0)
        gi1 = jnp.dot(h0.astype(jnp.bfloat16), wih1,
                      preferred_element_type=jnp.float32) + bi1
        h1 = gru_cell(gi1, h1, whh1, bhn1)
        h1all_ref[pl.ds(row, B), :] = h1
        return h0, h1

    h_init = jnp.zeros((B, H), jnp.float32)      # hidden=None -> zeros
    h0_f, h1_f = jax.lax.fori_loop(0, seq_len, step, (h_init, h_init),
                                   unroll=min(seq_len, 8))

    hid_ref[0] = h0_f
    hid_ref[1] = h1_f

    # ---- epilogue: fused Linear head + tanh on the rho chunk, lane-dense ----
    y = (jnp.dot(h1all_ref[...].astype(jnp.bfloat16), wlin_ref[...],
                 preferred_element_type=jnp.float32)
         + blin_ref[...])                                         # (S*B, out_pad)
    col = jax.lax.broadcasted_iota(jnp.int32, y.shape, 1)
    rho_mask = (col >= 4 * n_gaussian) & (col < 5 * n_gaussian)
    y = jnp.where(rho_mask, jnp.tanh(y), y)
    out_ref[...] = y.astype(out_ref.dtype)


def gaussian_writing_gru(x, params, *, n_gaussian, rnn_size):
    """x: (seq_len, batch, input_size) float32 (time-major, like nn.GRU with
    batch_first=False).  Returns the same 8-tuple as the PyTorch module:
    (mu1, mu2, log_sigma1, log_sigma2, rho, pi_logits, z0_logits, hidden)."""
    seq, batch, in_size = x.shape
    H = rnn_size
    n_output = 1 + 6 * n_gaussian
    out_pad = pl.cdiv(n_output, 128) * 128          # lane-dense head width
    B = max(8, ((batch + 7) // 8) * 8)              # sublane-aligned batch

    xp = x.astype(jnp.float32)
    if B != batch:
        xp = jnp.pad(xp, ((0, 0), (0, B - batch), (0, 0)))
    x2d = xp.reshape(seq * B, in_size)

    # Zero-pad the linear head to the lane-dense width (sliced off below).
    wlin_p = jnp.pad(params["wlin"], ((0, 0), (0, out_pad - n_output)))
    blin_p = jnp.pad(params["blin"], ((0, 0), (0, out_pad - n_output)))

    param_list = [params["wih0"], params["whh0"], params["bi0"], params["bhn0"],
                  params["wih1"], params["whh1"], params["bi1"], params["bhn1"],
                  wlin_p, blin_p]

    def full_spec(a):
        return pl.BlockSpec(a.shape, lambda i, nd=a.ndim: (0,) * nd)

    grid_spec = pltpu.PrefetchScalarGridSpec(
        num_scalar_prefetch=0,
        grid=(1,),
        in_specs=[full_spec(x2d)] + [full_spec(p) for p in param_list],
        out_specs=[pl.BlockSpec((seq * B, out_pad), lambda i: (0, 0)),
                   pl.BlockSpec((2, B, H), lambda i: (0, 0, 0))],
        scratch_shapes=[pltpu.VMEM((seq * B, 3 * H), jnp.float32),   # xproj
                        pltpu.VMEM((seq * B, H), jnp.float32)],      # h1 per step
    )

    out2d, hidden = pl.pallas_call(
        functools.partial(_gru_kernel, seq_len=seq, batch=B,
                          rnn_size=H, n_gaussian=n_gaussian),
        out_shape=(jax.ShapeDtypeStruct((seq * B, out_pad), jnp.float32),
                   jax.ShapeDtypeStruct((2, B, H), jnp.float32)),
        grid_spec=grid_spec,
        compiler_params=pltpu.CompilerParams(
            dimension_semantics=("arbitrary",)),
    )(x2d, *param_list)

    # Un-pad batch / head width; flatten time-major like output.view(-1, H).
    flat = (out2d.reshape(seq, B, out_pad)[:, :batch, :n_output]
            .reshape(seq * batch, n_output))
    hidden = hidden[:, :batch, :]

    n = n_gaussian
    mu1        = flat[:, 0 * n:1 * n]
    mu2        = flat[:, 1 * n:2 * n]
    log_sigma1 = flat[:, 2 * n:3 * n]
    log_sigma2 = flat[:, 3 * n:4 * n]
    rho        = flat[:, 4 * n:5 * n]   # tanh already applied in-kernel
    pi_logits  = flat[:, 5 * n:6 * n]
    z0_logits  = flat[:, 6 * n:]        # width-1 remainder chunk
    return mu1, mu2, log_sigma1, log_sigma2, rho, pi_logits, z0_logits, hidden


def init_params(key, *, input_size, rnn_size, n_gaussian):
    """Synthetic params with nn.GRU / nn.Linear shapes, repacked for the
    kernel: gate-fused, pre-transposed (in, 3H) weights in PyTorch [r,z,n]
    order, bf16 matmul weights, pre-summed r/z biases, f32 biases."""
    H = rnn_size
    n_output = 1 + 6 * n_gaussian
    ks = jax.random.split(key, 10)
    s = 1.0 / float(H) ** 0.5
    u = lambda k, shape: jax.random.uniform(k, shape, jnp.float32, -s, s)

    def pack_layer(kw_ih, kw_hh, kb, in_features):
        w_ih = u(kw_ih, (3 * H, in_features))          # PyTorch layout [r,z,n]
        w_hh = u(kw_hh, (3 * H, H))
        kb1, kb2 = jax.random.split(kb)
        b_ih = u(kb1, (3 * H,))
        b_hh = u(kb2, (3 * H,))
        wih = w_ih.T.astype(jnp.bfloat16)              # (in, 3H)
        whh = w_hh.T.astype(jnp.bfloat16)              # (H, 3H)
        bi = jnp.concatenate([b_ih[:2 * H] + b_hh[:2 * H], b_ih[2 * H:]])[None, :]
        bhn = b_hh[2 * H:][None, :]                    # (1, H)
        return wih, whh, bi, bhn

    wih0, whh0, bi0, bhn0 = pack_layer(ks[0], ks[1], ks[2], input_size)
    wih1, whh1, bi1, bhn1 = pack_layer(ks[3], ks[4], ks[5], H)
    wlin = u(ks[6], (n_output, H)).T.astype(jnp.bfloat16)   # (H, n_output)
    blin = u(ks[7], (n_output,))[None, :]                   # (1, n_output)
    return dict(wih0=wih0, whh0=whh0, bi0=bi0, bhn0=bhn0,
                wih1=wih1, whh1=whh1, bi1=bi1, bhn1=bhn1,
                wlin=wlin, blin=blin)


def _reference(x, params, *, n_gaussian, rnn_size):
    """Pure-JAX f32 reference with the same packed params (for sanity)."""
    H = rnn_size
    f32 = lambda a: a.astype(jnp.float32)
    wih0, whh0 = f32(params["wih0"]), f32(params["whh0"])
    wih1, whh1 = f32(params["wih1"]), f32(params["whh1"])
    bi0, bhn0 = params["bi0"], params["bhn0"]
    bi1, bhn1 = params["bi1"], params["bhn1"]
    wlin, blin = f32(params["wlin"]), params["blin"]

    def cell(gi, h, whh, bhn):
        gh = h @ whh
        r = jax.nn.sigmoid(gi[:, :H] + gh[:, :H])
        z = jax.nn.sigmoid(gi[:, H:2 * H] + gh[:, H:2 * H])
        n = jnp.tanh(gi[:, 2 * H:] + r * (gh[:, 2 * H:] + bhn))
        return (1.0 - z) * n + z * h

    def step(carry, x_t):
        h0, h1 = carry
        h0 = cell(x_t @ wih0 + bi0, h0, whh0, bhn0)
        h1 = cell(h0 @ wih1 + bi1, h1, whh1, bhn1)
        return (h0, h1), h1

    seq, batch, _ = x.shape
    h0 = jnp.zeros((batch, H), jnp.float32)
    (h0, h1), hs = jax.lax.scan(step, (h0, h0), x)
    y = hs.reshape(seq * batch, H) @ wlin + blin
    n = n_gaussian
    rho = jnp.tanh(y[:, 4 * n:5 * n])
    return (y[:, :n], y[:, n:2 * n], y[:, 2 * n:3 * n], y[:, 3 * n:4 * n],
            rho, y[:, 5 * n:6 * n], y[:, 6 * n:], jnp.stack([h0, h1]))


if __name__ == "__main__":
    # Small shapes consistent with the module's forward.
    seq_len, batch, input_size = 8, 2, 3
    rnn_size, n_gaussian = 32, 4

    key = jax.random.PRNGKey(0)
    k_x, k_p = jax.random.split(key)
    x = jax.random.normal(k_x, (seq_len, batch, input_size), dtype=jnp.float32)
    params = init_params(k_p, input_size=input_size, rnn_size=rnn_size,
                         n_gaussian=n_gaussian)

    outs = gaussian_writing_gru(x, params, n_gaussian=n_gaussian,
                                rnn_size=rnn_size)
    outs = jax.block_until_ready(outs)

    mu1, mu2, ls1, ls2, rho, pi_logits, z0_logits, hidden = outs
    assert mu1.shape == (seq_len * batch, n_gaussian)
    assert rho.shape == (seq_len * batch, n_gaussian)
    assert z0_logits.shape == (seq_len * batch, 1)
    assert hidden.shape == (2, batch, rnn_size)
    assert bool(jnp.all(jnp.abs(rho) <= 1.0))

    # Numerical sanity vs f32 reference (kernel matmuls are bf16/f32-acc).
    refs = _reference(x, params, n_gaussian=n_gaussian, rnn_size=rnn_size)
    for got, ref in zip(outs, refs):
        assert float(jnp.max(jnp.abs(got - ref))) < 5e-2

    print("KERNEL_OK")
</pallas_src>

<mosaic_0001>
module attributes {stable_mosaic.version = 11 : i64} {
  func.func @_gru_kernel(%arg0: i32, %arg1: memref<64x3xf32, #tpu.memory_space<vmem>>, %arg2: memref<3x96xbf16, #tpu.memory_space<vmem>>, %arg3: memref<32x96xbf16, #tpu.memory_space<vmem>>, %arg4: memref<1x96xf32, #tpu.memory_space<vmem>>, %arg5: memref<1x32xf32, #tpu.memory_space<vmem>>, %arg6: memref<32x96xbf16, #tpu.memory_space<vmem>>, %arg7: memref<32x96xbf16, #tpu.memory_space<vmem>>, %arg8: memref<1x96xf32, #tpu.memory_space<vmem>>, %arg9: memref<1x32xf32, #tpu.memory_space<vmem>>, %arg10: memref<32x128xbf16, #tpu.memory_space<vmem>>, %arg11: memref<1x128xf32, #tpu.memory_space<vmem>>, %arg12: memref<64x128xf32, #tpu.memory_space<vmem>>, %arg13: memref<2x8x32xf32, #tpu.memory_space<vmem>>, %arg14: memref<64x96xf32, #tpu.memory_space<vmem>>, %arg15: memref<64x32xf32, #tpu.memory_space<vmem>>) attributes {dimension_semantics = [#tpu.dimension_semantics<arbitrary>], iteration_bounds = array<i64: 1>, scalar_prefetch = 0 : i64, scratch_operands = 2 : i64, tpu.core_type = #tpu.core_type<tc>, window_params = [{pipeline_mode = #tpu.pipeline_mode<synchronous>, transform_indices = @transform_0, window_bounds = array<i64: 64, 3>}, {pipeline_mode = #tpu.pipeline_mode<synchronous>, transform_indices = @transform_1, window_bounds = array<i64: 3, 96>}, {pipeline_mode = #tpu.pipeline_mode<synchronous>, transform_indices = @transform_2, window_bounds = array<i64: 32, 96>}, {pipeline_mode = #tpu.pipeline_mode<synchronous>, transform_indices = @transform_3, window_bounds = array<i64: 1, 96>}, {pipeline_mode = #tpu.pipeline_mode<synchronous>, transform_indices = @transform_4, window_bounds = array<i64: 1, 32>}, {pipeline_mode = #tpu.pipeline_mode<synchronous>, transform_indices = @transform_5, window_bounds = array<i64: 32, 96>}, {pipeline_mode = #tpu.pipeline_mode<synchronous>, transform_indices = @transform_6, window_bounds = array<i64: 32, 96>}, {pipeline_mode = #tpu.pipeline_mode<synchronous>, transform_indices = @transform_7, window_bounds = array<i64: 1, 96>}, {pipeline_mode = #tpu.pipeline_mode<synchronous>, transform_indices = @transform_8, window_bounds = array<i64: 1, 32>}, {pipeline_mode = #tpu.pipeline_mode<synchronous>, transform_indices = @transform_9, window_bounds = array<i64: 32, 128>}, {pipeline_mode = #tpu.pipeline_mode<synchronous>, transform_indices = @transform_10, window_bounds = array<i64: 1, 128>}, {pipeline_mode = #tpu.pipeline_mode<synchronous>, transform_indices = @transform_11, window_bounds = array<i64: 64, 128>}, {pipeline_mode = #tpu.pipeline_mode<synchronous>, transform_indices = @transform_12, window_bounds = array<i64: 2, 8, 32>}]} {
    %c0 = arith.constant 0 : index
    %c0_0 = arith.constant 0 : index
    %0 = vector.load %arg1[%c0, %c0_0] : memref<64x3xf32, #tpu.memory_space<vmem>>, vector<64x3xf32>
    %1 = arith.truncf %0 : vector<64x3xf32> to vector<64x3xbf16>
    %c0_1 = arith.constant 0 : index
    %c0_2 = arith.constant 0 : index
    %2 = vector.load %arg2[%c0_1, %c0_2] : memref<3x96xbf16, #tpu.memory_space<vmem>>, vector<3x96xbf16>
    %cst = arith.constant dense<0.000000e+00> : vector<64x96xf32>
    %3 = tpu.matmul %1, %2, %cst {dimension_numbers = #tpu.dot_dimension_numbers<[1], [0], [0], [1], [0, 0, 1, 1], [], []>} : vector<64x3xbf16>, vector<3x96xbf16>, vector<64x96xf32> -> vector<64x96xf32>
    %c0_3 = arith.constant 0 : index
    %c0_4 = arith.constant 0 : index
    %4 = vector.load %arg4[%c0_3, %c0_4] : memref<1x96xf32, #tpu.memory_space<vmem>>, vector<1x96xf32>
    %5 = vector.broadcast %4 : vector<1x96xf32> to vector<64x96xf32>
    %6 = arith.addf %3, %5 : vector<64x96xf32>
    %c0_5 = arith.constant 0 : index
    %c0_6 = arith.constant 0 : index
    %7 = vector.load %arg14[%c0_5, %c0_6] : memref<64x96xf32, #tpu.memory_space<vmem>>, vector<64x96xf32>
    tpu.vector_store %arg14[%c0_5, %c0_6], %6 {strides = array<i32>} : memref<64x96xf32, #tpu.memory_space<vmem>>, vector<64x96xf32>,
    %c0_7 = arith.constant 0 : index
    %c0_8 = arith.constant 0 : index
    %8 = vector.load %arg3[%c0_7, %c0_8] : memref<32x96xbf16, #tpu.memory_space<vmem>>, vector<32x96xbf16>
    %c0_9 = arith.constant 0 : index
    %c0_10 = arith.constant 0 : index
    %9 = vector.load %arg6[%c0_9, %c0_10] : memref<32x96xbf16, #tpu.memory_space<vmem>>, vector<32x96xbf16>
    %c0_11 = arith.constant 0 : index
    %c0_12 = arith.constant 0 : index
    %10 = vector.load %arg7[%c0_11, %c0_12] : memref<32x96xbf16, #tpu.memory_space<vmem>>, vector<32x96xbf16>
    %c0_13 = arith.constant 0 : index
    %c0_14 = arith.constant 0 : index
    %11 = vector.load %arg8[%c0_13, %c0_14] : memref<1x96xf32, #tpu.memory_space<vmem>>, vector<1x96xf32>
    %12 = vector.shape_cast %11 : vector<1x96xf32> to vector<1x96xf32>
    %13 = vector.broadcast %12 : vector<1x96xf32> to vector<8x96xf32>
    %c0_15 = arith.constant 0 : index
    %c0_16 = arith.constant 0 : index
    %14 = vector.load %arg5[%c0_15, %c0_16] : memref<1x32xf32, #tpu.memory_space<vmem>>, vector<1x32xf32>
    %15 = vector.shape_cast %14 : vector<1x32xf32> to vector<1x32xf32>
    %16 = vector.broadcast %15 : vector<1x32xf32> to vector<8x32xf32>
    %c0_17 = arith.constant 0 : index
    %c0_18 = arith.constant 0 : index
    %17 = vector.load %arg9[%c0_17, %c0_18] : memref<1x32xf32, #tpu.memory_space<vmem>>, vector<1x32xf32>
    %18 = vector.shape_cast %17 : vector<1x32xf32> to vector<1x32xf32>
    %19 = vector.broadcast %18 : vector<1x32xf32> to vector<8x32xf32>
    %cst_19 = arith.constant 0.000000e+00 : f32
    %20 = vector.broadcast %cst_19 : f32 to vector<8x32xf32>
    %c0_i32 = arith.constant 0 : i32
    %c8_i32 = arith.constant 8 : i32
    %21 = arith.muli %c0_i32, %c8_i32 : i32
    %22 = tpu.assume_multiple %21, 8 : i32
    %23 = arith.index_cast %22 : i32 to index
    %c0_20 = arith.constant 0 : index
    %24 = vector.load %arg14[%23, %c0_20] : memref<64x96xf32, #tpu.memory_space<vmem>>, vector<8x96xf32>
    %25 = arith.truncf %20 : vector<8x32xf32> to vector<8x32xbf16>
    %cst_21 = arith.constant dense<0.000000e+00> : vector<8x96xf32>
    %26 = tpu.matmul %25, %8, %cst_21 {dimension_numbers = #tpu.dot_dimension_numbers<[1], [0], [0], [1], [0, 0, 1, 1], [], []>} : vector<8x32xbf16>, vector<32x96xbf16>, vector<8x96xf32> -> vector<8x96xf32>
    %27 = vector.extract_strided_slice %24 {offsets = [0, 0], sizes = [8, 32], strides = [1, 1]} : vector<8x96xf32> to vector<8x32xf32>
    %28 = vector.extract_strided_slice %26 {offsets = [0, 0], sizes = [8, 32], strides = [1, 1]} : vector<8x96xf32> to vector<8x32xf32>
    %29 = arith.addf %27, %28 : vector<8x32xf32>
    %30 = arith.negf %29 : vector<8x32xf32>
    %31 = math.exp %30 : vector<8x32xf32>
    %cst_22 = arith.constant 1.000000e+00 : f32
    %32 = vector.broadcast %cst_22 : f32 to vector<8x32xf32>
    %33 = arith.addf %32, %31 : vector<8x32xf32>
    %34 = arith.divf %32, %33 : vector<8x32xf32>
    %35 = vector.extract_strided_slice %24 {offsets = [0, 32], sizes = [8, 32], strides = [1, 1]} : vector<8x96xf32> to vector<8x32xf32>
    %36 = vector.extract_strided_slice %26 {offsets = [0, 32], sizes = [8, 32], strides = [1, 1]} : vector<8x96xf32> to vector<8x32xf32>
    %37 = arith.addf %35, %36 : vector<8x32xf32>
    %38 = arith.negf %37 : vector<8x32xf32>
    %39 = math.exp %38 : vector<8x32xf32>
    %cst_23 = arith.constant 1.000000e+00 : f32
    %40 = vector.broadcast %cst_23 : f32 to vector<8x32xf32>
    %41 = arith.addf %40, %39 : vector<8x32xf32>
    %42 = arith.divf %40, %41 : vector<8x32xf32>
    %43 = vector.extract_strided_slice %24 {offsets = [0, 64], sizes = [8, 32], strides = [1, 1]} : vector<8x96xf32> to vector<8x32xf32>
    %44 = vector.extract_strided_slice %26 {offsets = [0, 64], sizes = [8, 32], strides = [1, 1]} : vector<8x96xf32> to vector<8x32xf32>
    %45 = arith.addf %44, %16 : vector<8x32xf32>
    %46 = arith.mulf %34, %45 : vector<8x32xf32>
    %47 = arith.addf %43, %46 : vector<8x32xf32>
    %48 = math.tanh %47 : vector<8x32xf32>
    %cst_24 = arith.constant 1.000000e+00 : f32
    %49 = vector.broadcast %cst_24 : f32 to vector<8x32xf32>
    %50 = arith.subf %49, %42 : vector<8x32xf32>
    %51 = arith.mulf %50, %48 : vector<8x32xf32>
    %52 = arith.mulf %42, %20 : vector<8x32xf32>
    %53 = arith.addf %51, %52 : vector<8x32xf32>
    %54 = arith.truncf %53 : vector<8x32xf32> to vector<8x32xbf16>
    %cst_25 = arith.constant dense<0.000000e+00> : vector<8x96xf32>
    %55 = tpu.matmul %54, %9, %cst_25 {dimension_numbers = #tpu.dot_dimension_numbers<[1], [0], [0], [1], [0, 0, 1, 1], [], []>} : vector<8x32xbf16>, vector<32x96xbf16>, vector<8x96xf32> -> vector<8x96xf32>
    %56 = arith.addf %55, %13 : vector<8x96xf32>
    %57 = arith.truncf %20 : vector<8x32xf32> to vector<8x32xbf16>
    %cst_26 = arith.constant dense<0.000000e+00> : vector<8x96xf32>
    %58 = tpu.matmul %57, %10, %cst_26 {dimension_numbers = #tpu.dot_dimension_numbers<[1], [0], [0], [1], [0, 0, 1, 1], [], []>} : vector<8x32xbf16>, vector<32x96xbf16>, vector<8x96xf32> -> vector<8x96xf32>
    %59 = vector.extract_strided_slice %56 {offsets = [0, 0], sizes = [8, 32], strides = [1, 1]} : vector<8x96xf32> to vector<8x32xf32>
    %60 = vector.extract_strided_slice %58 {offsets = [0, 0], sizes = [8, 32], strides = [1, 1]} : vector<8x96xf32> to vector<8x32xf32>
    %61 = arith.addf %59, %60 : vector<8x32xf32>
    %62 = arith.negf %61 : vector<8x32xf32>
    %63 = math.exp %62 : vector<8x32xf32>
    %cst_27 = arith.constant 1.000000e+00 : f32
    %64 = vector.broadcast %cst_27 : f32 to vector<8x32xf32>
    %65 = arith.addf %64, %63 : vector<8x32xf32>
    %66 = arith.divf %64, %65 : vector<8x32xf32>
    %67 = vector.extract_strided_slice %56 {offsets = [0, 32], sizes = [8, 32], strides = [1, 1]} : vector<8x96xf32> to vector<8x32xf32>
    %68 = vector.extract_strided_slice %58 {offsets = [0, 32], sizes = [8, 32], strides = [1, 1]} : vector<8x96xf32> to vector<8x32xf32>
    %69 = arith.addf %67, %68 : vector<8x32xf32>
    %70 = arith.negf %69 : vector<8x32xf32>
    %71 = math.exp %70 : vector<8x32xf32>
    %cst_28 = arith.constant 1.000000e+00 : f32
    %72 = vector.broadcast %cst_28 : f32 to vector<8x32xf32>
    %73 = arith.addf %72, %71 : vector<8x32xf32>
    %74 = arith.divf %72, %73 : vector<8x32xf32>
    %75 = vector.extract_strided_slice %56 {offsets = [0, 64], sizes = [8, 32], strides = [1, 1]} : vector<8x96xf32> to vector<8x32xf32>
    %76 = vector.extract_strided_slice %58 {offsets = [0, 64], sizes = [8, 32], strides = [1, 1]} : vector<8x96xf32> to vector<8x32xf32>
    %77 = arith.addf %76, %19 : vector<8x32xf32>
    %78 = arith.mulf %66, %77 : vector<8x32xf32>
    %79 = arith.addf %75, %78 : vector<8x32xf32>
    %80 = math.tanh %79 : vector<8x32xf32>
    %cst_29 = arith.constant 1.000000e+00 : f32
    %81 = vector.broadcast %cst_29 : f32 to vector<8x32xf32>
    %82 = arith.subf %81, %74 : vector<8x32xf32>
    %83 = arith.mulf %82, %80 : vector<8x32xf32>
    %84 = arith.mulf %74, %20 : vector<8x32xf32>
    %85 = arith.addf %83, %84 : vector<8x32xf32>
    %86 = arith.index_cast %22 : i32 to index
    %c0_30 = arith.constant 0 : index
    %87 = vector.load %arg15[%86, %c0_30] : memref<64x32xf32, #tpu.memory_space<vmem>>, vector<8x32xf32>
    tpu.vector_store %arg15[%86, %c0_30], %85 {strides = array<i32>} : memref<64x32xf32, #tpu.memory_space<vmem>>, vector<8x32xf32>,
    %c1_i32 = arith.constant 1 : i32
    %c8_i32_31 = arith.constant 8 : i32
    %88 = arith.muli %c1_i32, %c8_i32_31 : i32
    %89 = tpu.assume_multiple %88, 8 : i32
    %90 = arith.index_cast %89 : i32 to index
    %c0_32 = arith.constant 0 : index
    %91 = vector.load %arg14[%90, %c0_32] : memref<64x96xf32, #tpu.memory_space<vmem>>, vector<8x96xf32>
    %92 = arith.truncf %53 : vector<8x32xf32> to vector<8x32xbf16>
    %cst_33 = arith.constant dense<0.000000e+00> : vector<8x96xf32>
    %93 = tpu.matmul %92, %8, %cst_33 {dimension_numbers = #tpu.dot_dimension_numbers<[1], [0], [0], [1], [0, 0, 1, 1], [], []>} : vector<8x32xbf16>, vector<32x96xbf16>, vector<8x96xf32> -> vector<8x96xf32>
    %94 = vector.extract_strided_slice %91 {offsets = [0, 0], sizes = [8, 32], strides = [1, 1]} : vector<8x96xf32> to vector<8x32xf32>
    %95 = vector.extract_strided_slice %93 {offsets = [0, 0], sizes = [8, 32], strides = [1, 1]} : vector<8x96xf32> to vector<8x32xf32>
    %96 = arith.addf %94, %95 : vector<8x32xf32>
    %97 = arith.negf %96 : vector<8x32xf32>
    %98 = math.exp %97 : vector<8x32xf32>
    %cst_34 = arith.constant 1.000000e+00 : f32
    %99 = vector.broadcast %cst_34 : f32 to vector<8x32xf32>
    %100 = arith.addf %99, %98 : vector<8x32xf32>
    %101 = arith.divf %99, %100 : vector<8x32xf32>
    %102 = vector.extract_strided_slice %91 {offsets = [0, 32], sizes = [8, 32], strides = [1, 1]} : vector<8x96xf32> to vector<8x32xf32>
    %103 = vector.extract_strided_slice %93 {offsets = [0, 32], sizes = [8, 32], strides = [1, 1]} : vector<8x96xf32> to vector<8x32xf32>
    %104 = arith.addf %102, %103 : vector<8x32xf32>
    %105 = arith.negf %104 : vector<8x32xf32>
    %106 = math.exp %105 : vector<8x32xf32>
    %cst_35 = arith.constant 1.000000e+00 : f32
    %107 = vector.broadcast %cst_35 : f32 to vector<8x32xf32>
    %108 = arith.addf %107, %106 : vector<8x32xf32>
    %109 = arith.divf %107, %108 : vector<8x32xf32>
    %110 = vector.extract_strided_slice %91 {offsets = [0, 64], sizes = [8, 32], strides = [1, 1]} : vector<8x96xf32> to vector<8x32xf32>
    %111 = vector.extract_strided_slice %93 {offsets = [0, 64], sizes = [8, 32], strides = [1, 1]} : vector<8x96xf32> to vector<8x32xf32>
    %112 = arith.addf %111, %16 : vector<8x32xf32>
    %113 = arith.mulf %101, %112 : vector<8x32xf32>
    %114 = arith.addf %110, %113 : vector<8x32xf32>
    %115 = math.tanh %114 : vector<8x32xf32>
    %cst_36 = arith.constant 1.000000e+00 : f32
    %116 = vector.broadcast %cst_36 : f32 to vector<8x32xf32>
    %117 = arith.subf %116, %109 : vector<8x32xf32>
    %118 = arith.mulf %117, %115 : vector<8x32xf32>
    %119 = arith.mulf %109, %53 : vector<8x32xf32>
    %120 = arith.addf %118, %119 : vector<8x32xf32>
    %121 = arith.truncf %120 : vector<8x32xf32> to vector<8x32xbf16>
    %cst_37 = arith.constant dense<0.000000e+00> : vector<8x96xf32>
    %122 = tpu.matmul %121, %9, %cst_37 {dimension_numbers = #tpu.dot_dimension_numbers<[1], [0], [0], [1], [0, 0, 1, 1], [], []>} : vector<8x32xbf16>, vector<32x96xbf16>, vector<8x96xf32> -> vector<8x96xf32>
    %123 = arith.addf %122, %13 : vector<8x96xf32>
    %124 = arith.truncf %85 : vector<8x32xf32> to vector<8x32xbf16>
    %cst_38 = arith.constant dense<0.000000e+00> : vector<8x96xf32>
    %125 = tpu.matmul %124, %10, %cst_38 {dimension_numbers = #tpu.dot_dimension_numbers<[1], [0], [0], [1], [0, 0, 1, 1], [], []>} : vector<8x32xbf16>, vector<32x96xbf16>, vector<8x96xf32> -> vector<8x96xf32>
    %126 = vector.extract_strided_slice %123 {offsets = [0, 0], sizes = [8, 32], strides = [1, 1]} : vector<8x96xf32> to vector<8x32xf32>
    %127 = vector.extract_strided_slice %125 {offsets = [0, 0], sizes = [8, 32], strides = [1, 1]} : vector<8x96xf32> to vector<8x32xf32>
    %128 = arith.addf %126, %127 : vector<8x32xf32>
    %129 = arith.negf %128 : vector<8x32xf32>
    %130 = math.exp %129 : vector<8x32xf32>
    %cst_39 = arith.constant 1.000000e+00 : f32
    %131 = vector.broadcast %cst_39 : f32 to vector<8x32xf32>
    %132 = arith.addf %131, %130 : vector<8x32xf32>
    %133 = arith.divf %131, %132 : vector<8x32xf32>
    %134 = vector.extract_strided_slice %123 {offsets = [0, 32], sizes = [8, 32], strides = [1, 1]} : vector<8x96xf32> to vector<8x32xf32>
    %135 = vector.extract_strided_slice %125 {offsets = [0, 32], sizes = [8, 32], strides = [1, 1]} : vector<8x96xf32> to vector<8x32xf32>
    %136 = arith.addf %134, %135 : vector<8x32xf32>
    %137 = arith.negf %136 : vector<8x32xf32>
    %138 = math.exp %137 : vector<8x32xf32>
    %cst_40 = arith.constant 1.000000e+00 : f32
    %139 = vector.broadcast %cst_40 : f32 to vector<8x32xf32>
    %140 = arith.addf %139, %138 : vector<8x32xf32>
    %141 = arith.divf %139, %140 : vector<8x32xf32>
    %142 = vector.extract_strided_slice %123 {offsets = [0, 64], sizes = [8, 32], strides = [1, 1]} : vector<8x96xf32> to vector<8x32xf32>
    %143 = vector.extract_strided_slice %125 {offsets = [0, 64], sizes = [8, 32], strides = [1, 1]} : vector<8x96xf32> to vector<8x32xf32>
    %144 = arith.addf %143, %19 : vector<8x32xf32>
    %145 = arith.mulf %133, %144 : vector<8x32xf32>
    %146 = arith.addf %142, %145 : vector<8x32xf32>
    %147 = math.tanh %146 : vector<8x32xf32>
    %cst_41 = arith.constant 1.000000e+00 : f32
    %148 = vector.broadcast %cst_41 : f32 to vector<8x32xf32>
    %149 = arith.subf %148, %141 : vector<8x32xf32>
    %150 = arith.mulf %149, %147 : vector<8x32xf32>
    %151 = arith.mulf %141, %85 : vector<8x32xf32>
    %152 = arith.addf %150, %151 : vector<8x32xf32>
    %153 = arith.index_cast %89 : i32 to index
    %c0_42 = arith.constant 0 : index
    %154 = vector.load %arg15[%153, %c0_42] : memref<64x32xf32, #tpu.memory_space<vmem>>, vector<8x32xf32>
    tpu.vector_store %arg15[%153, %c0_42], %152 {strides = array<i32>} : memref<64x32xf32, #tpu.memory_space<vmem>>, vector<8x32xf32>,
    %c2_i32 = arith.constant 2 : i32
    %c8_i32_43 = arith.constant 8 : i32
    %155 = arith.muli %c2_i32, %c8_i32_43 : i32
    %156 = tpu.assume_multiple %155, 8 : i32
    %157 = arith.index_cast %156 : i32 to index
    %c0_44 = arith.constant 0 : index
    %158 = vector.load %arg14[%157, %c0_44] : memref<64x96xf32, #tpu.memory_space<vmem>>, vector<8x96xf32>
    %159 = arith.truncf %120 : vector<8x32xf32> to vector<8x32xbf16>
    %cst_45 = arith.constant dense<0.000000e+00> : vector<8x96xf32>
    %160 = tpu.matmul %159, %8, %cst_45 {dimension_numbers = #tpu.dot_dimension_numbers<[1], [0], [0], [1], [0, 0, 1, 1], [], []>} : vector<8x32xbf16>, vector<32x96xbf16>, vector<8x96xf32> -> vector<8x96xf32>
    %161 = vector.extract_strided_slice %158 {offsets = [0, 0], sizes = [8, 32], strides = [1, 1]} : vector<8x96xf32> to vector<8x32xf32>
    %162 = vector.extract_strided_slice %160 {offsets = [0, 0], sizes = [8, 32], strides = [1, 1]} : vector<8x96xf32> to vector<8x32xf32>
    %163 = arith.addf %161, %162 : vector<8x32xf32>
    %164 = arith.negf %163 : vector<8x32xf32>
    %165 = math.exp %164 : vector<8x32xf32>
    %cst_46 = arith.constant 1.000000e+00 : f32
    %166 = vector.broadcast %cst_46 : f32 to vector<8x32xf32>
    %167 = arith.addf %166, %165 : vector<8x32xf32>
    %168 = arith.divf %166, %167 : vector<8x32xf32>
    %169 = vector.extract_strided_slice %158 {offsets = [0, 32], sizes = [8, 32], strides = [1, 1]} : vector<8x96xf32> to vector<8x32xf32>
    %170 = vector.extract_strided_slice %160 {offsets = [0, 32], sizes = [8, 32], strides = [1, 1]} : vector<8x96xf32> to vector<8x32xf32>
    %171 = arith.addf %169, %170 : vector<8x32xf32>
    %172 = arith.negf %171 : vector<8x32xf32>
    %173 = math.exp %172 : vector<8x32xf32>
    %cst_47 = arith.constant 1.000000e+00 : f32
    %174 = vector.broadcast %cst_47 : f32 to vector<8x32xf32>
    %175 = arith.addf %174, %173 : vector<8x32xf32>
    %176 = arith.divf %174, %175 : vector<8x32xf32>
    %177 = vector.extract_strided_slice %158 {offsets = [0, 64], sizes = [8, 32], strides = [1, 1]} : vector<8x96xf32> to vector<8x32xf32>
    %178 = vector.extract_strided_slice %160 {offsets = [0, 64], sizes = [8, 32], strides = [1, 1]} : vector<8x96xf32> to vector<8x32xf32>
    %179 = arith.addf %178, %16 : vector<8x32xf32>
    %180 = arith.mulf %168, %179 : vector<8x32xf32>
    %181 = arith.addf %177, %180 : vector<8x32xf32>
    %182 = math.tanh %181 : vector<8x32xf32>
    %cst_48 = arith.constant 1.000000e+00 : f32
    %183 = vector.broadcast %cst_48 : f32 to vector<8x32xf32>
    %184 = arith.subf %183, %176 : vector<8x32xf32>
    %185 = arith.mulf %184, %182 : vector<8x32xf32>
    %186 = arith.mulf %176, %120 : vector<8x32xf32>
    %187 = arith.addf %185, %186 : vector<8x32xf32>
    %188 = arith.truncf %187 : vector<8x32xf32> to vector<8x32xbf16>
    %cst_49 = arith.constant dense<0.000000e+00> : vector<8x96xf32>
    %189 = tpu.matmul %188, %9, %cst_49 {dimension_numbers = #tpu.dot_dimension_numbers<[1], [0], [0], [1], [0, 0, 1, 1], [], []>} : vector<8x32xbf16>, vector<32x96xbf16>, vector<8x96xf32> -> vector<8x96xf32>
    %190 = arith.addf %189, %13 : vector<8x96xf32>
    %191 = arith.truncf %152 : vector<8x32xf32> to vector<8x32xbf16>
    %cst_50 = arith.constant dense<0.000000e+00> : vector<8x96xf32>
    %192 = tpu.matmul %191, %10, %cst_50 {dimension_numbers = #tpu.dot_dimension_numbers<[1], [0], [0], [1], [0, 0, 1, 1], [], []>} : vector<8x32xbf16>, vector<32x96xbf16>, vector<8x96xf32> -> vector<8x96xf32>
    %193 = vector.extract_strided_slice %190 {offsets = [0, 0], sizes = [8, 32], strides = [1, 1]} : vector<8x96xf32> to vector<8x32xf32>
    %194 = vector.extract_strided_slice %192 {offsets = [0, 0], sizes = [8, 32], strides = [1, 1]} : vector<8x96xf32> to vector<8x32xf32>
    %195 = arith.addf %193, %194 : vector<8x32xf32>
    %196 = arith.negf %195 : vector<8x32xf32>
    %197 = math.exp %196 : vector<8x32xf32>
    %cst_51 = arith.constant 1.000000e+00 : f32
    %198 = vector.broadcast %cst_51 : f32 to vector<8x32xf32>
    %199 = arith.addf %198, %197 : vector<8x32xf32>
    %200 = arith.divf %198, %199 : vector<8x32xf32>
    %201 = vector.extract_strided_slice %190 {offsets = [0, 32], sizes = [8, 32], strides = [1, 1]} : vector<8x96xf32> to vector<8x32xf32>
    %202 = vector.extract_strided_slice %192 {offsets = [0, 32], sizes = [8, 32], strides = [1, 1]} : vector<8x96xf32> to vector<8x32xf32>
    %203 = arith.addf %201, %202 : vector<8x32xf32>
    %204 = arith.negf %203 : vector<8x32xf32>
    %205 = math.exp %204 : vector<8x32xf32>
    %cst_52 = arith.constant 1.000000e+00 : f32
    %206 = vector.broadcast %cst_52 : f32 to vector<8x32xf32>
    %207 = arith.addf %206, %205 : vector<8x32xf32>
    %208 = arith.divf %206, %207 : vector<8x32xf32>
    %209 = vector.extract_strided_slice %190 {offsets = [0, 64], sizes = [8, 32], strides = [1, 1]} : vector<8x96xf32> to vector<8x32xf32>
    %210 = vector.extract_strided_slice %192 {offsets = [0, 64], sizes = [8, 32], strides = [1, 1]} : vector<8x96xf32> to vector<8x32xf32>
    %211 = arith.addf %210, %19 : vector<8x32xf32>
    %212 = arith.mulf %200, %211 : vector<8x32xf32>
    %213 = arith.addf %209, %212 : vector<8x32xf32>
    %214 = math.tanh %213 : vector<8x32xf32>
    %cst_53 = arith.constant 1.000000e+00 : f32
    %215 = vector.broadcast %cst_53 : f32 to vector<8x32xf32>
    %216 = arith.subf %215, %208 : vector<8x32xf32>
    %217 = arith.mulf %216, %214 : vector<8x32xf32>
    %218 = arith.mulf %208, %152 : vector<8x32xf32>
    %219 = arith.addf %217, %218 : vector<8x32xf32>
    %220 = arith.index_cast %156 : i32 to index
    %c0_54 = arith.constant 0 : index
    %221 = vector.load %arg15[%220, %c0_54] : memref<64x32xf32, #tpu.memory_space<vmem>>, vector<8x32xf32>
    tpu.vector_store %arg15[%220, %c0_54], %219 {strides = array<i32>} : memref<64x32xf32, #tpu.memory_space<vmem>>, vector<8x32xf32>,
    %c3_i32 = arith.constant 3 : i32
    %c8_i32_55 = arith.constant 8 : i32
    %222 = arith.muli %c3_i32, %c8_i32_55 : i32
    %223 = tpu.assume_multiple %222, 8 : i32
    %224 = arith.index_cast %223 : i32 to index
    %c0_56 = arith.constant 0 : index
    %225 = vector.load %arg14[%224, %c0_56] : memref<64x96xf32, #tpu.memory_space<vmem>>, vector<8x96xf32>
    %226 = arith.truncf %187 : vector<8x32xf32> to vector<8x32xbf16>
    %cst_57 = arith.constant dense<0.000000e+00> : vector<8x96xf32>
    %227 = tpu.matmul %226, %8, %cst_57 {dimension_numbers = #tpu.dot_dimension_numbers<[1], [0], [0], [1], [0, 0, 1, 1], [], []>} : vector<8x32xbf16>, vector<32x96xbf16>, vector<8x96xf32> -> vector<8x96xf32>
    %228 = vector.extract_strided_slice %225 {offsets = [0, 0], sizes = [8, 32], strides = [1, 1]} : vector<8x96xf32> to vector<8x32xf32>
    %229 = vector.extract_strided_slice %227 {offsets = [0, 0], sizes = [8, 32], strides = [1, 1]} : vector<8x96xf32> to vector<8x32xf32>
    %230 = arith.addf %228, %229 : vector<8x32xf32>
    %231 = arith.negf %230 : vector<8x32xf32>
    %232 = math.exp %231 : vector<8x32xf32>
    %cst_58 = arith.constant 1.000000e+00 : f32
    %233 = vector.broadcast %cst_58 : f32 to vector<8x32xf32>
    %234 = arith.addf %233, %232 : vector<8x32xf32>
    %235 = arith.divf %233, %234 : vector<8x32xf32>
    %236 = vector.extract_strided_slice %225 {offsets = [0, 32], sizes = [8, 32], strides = [1, 1]} : vector<8x96xf32> to vector<8x32xf32>
    %237 = vector.extract_strided_slice %227 {offsets = [0, 32], sizes = [8, 32], strides = [1, 1]} : vector<8x96xf32> to vector<8x32xf32>
    %238 = arith.addf %236, %237 : vector<8x32xf32>
    %239 = arith.negf %238 : vector<8x32xf32>
    %240 = math.exp %239 : vector<8x32xf32>
    %cst_59 = arith.constant 1.000000e+00 : f32
    %241 = vector.broadcast %cst_59 : f32 to vector<8x32xf32>
    %242 = arith.addf %241, %240 : vector<8x32xf32>
    %243 = arith.divf %241, %242 : vector<8x32xf32>
    %244 = vector.extract_strided_slice %225 {offsets = [0, 64], sizes = [8, 32], strides = [1, 1]} : vector<8x96xf32> to vector<8x32xf32>
    %245 = vector.extract_strided_slice %227 {offsets = [0, 64], sizes = [8, 32], strides = [1, 1]} : vector<8x96xf32> to vector<8x32xf32>
    %246 = arith.addf %245, %16 : vector<8x32xf32>
    %247 = arith.mulf %235, %246 : vector<8x32xf32>
    %248 = arith.addf %244, %247 : vector<8x32xf32>
    %249 = math.tanh %248 : vector<8x32xf32>
    %cst_60 = arith.constant 1.000000e+00 : f32
    %250 = vector.broadcast %cst_60 : f32 to vector<8x32xf32>
    %251 = arith.subf %250, %243 : vector<8x32xf32>
    %252 = arith.mulf %251, %249 : vector<8x32xf32>
    %253 = arith.mulf %243, %187 : vector<8x32xf32>
    %254 = arith.addf %252, %253 : vector<8x32xf32>
    %255 = arith.truncf %254 : vector<8x32xf32> to vector<8x32xbf16>
    %cst_61 = arith.constant dense<0.000000e+00> : vector<8x96xf32>
    %256 = tpu.matmul %255, %9, %cst_61 {dimension_numbers = #tpu.dot_dimension_numbers<[1], [0], [0], [1], [0, 0, 1, 1], [], []>} : vector<8x32xbf16>, vector<32x96xbf16>, vector<8x96xf32> -> vector<8x96xf32>
    %257 = arith.addf %256, %13 : vector<8x96xf32>
    %258 = arith.truncf %219 : vector<8x32xf32> to vector<8x32xbf16>
    %cst_62 = arith.constant dense<0.000000e+00> : vector<8x96xf32>
    %259 = tpu.matmul %258, %10, %cst_62 {dimension_numbers = #tpu.dot_dimension_numbers<[1], [0], [0], [1], [0, 0, 1, 1], [], []>} : vector<8x32xbf16>, vector<32x96xbf16>, vector<8x96xf32> -> vector<8x96xf32>
    %260 = vector.extract_strided_slice %257 {offsets = [0, 0], sizes = [8, 32], strides = [1, 1]} : vector<8x96xf32> to vector<8x32xf32>
    %261 = vector.extract_strided_slice %259 {offsets = [0, 0], sizes = [8, 32], strides = [1, 1]} : vector<8x96xf32> to vector<8x32xf32>
    %262 = arith.addf %260, %261 : vector<8x32xf32>
    %263 = arith.negf %262 : vector<8x32xf32>
    %264 = math.exp %263 : vector<8x32xf32>
    %cst_63 = arith.constant 1.000000e+00 : f32
    %265 = vector.broadcast %cst_63 : f32 to vector<8x32xf32>
    %266 = arith.addf %265, %264 : vector<8x32xf32>
    %267 = arith.divf %265, %266 : vector<8x32xf32>
    %268 = vector.extract_strided_slice %257 {offsets = [0, 32], sizes = [8, 32], strides = [1, 1]} : vector<8x96xf32> to vector<8x32xf32>
    %269 = vector.extract_strided_slice %259 {offsets = [0, 32], sizes = [8, 32], strides = [1, 1]} : vector<8x96xf32> to vector<8x32xf32>
    %270 = arith.addf %268, %269 : vector<8x32xf32>
    %271 = arith.negf %270 : vector<8x32xf32>
    %272 = math.exp %271 : vector<8x32xf32>
    %cst_64 = arith.constant 1.000000e+00 : f32
    %273 = vector.broadcast %cst_64 : f32 to vector<8x32xf32>
    %274 = arith.addf %273, %272 : vector<8x32xf32>
    %275 = arith.divf %273, %274 : vector<8x32xf32>
    %276 = vector.extract_strided_slice %257 {offsets = [0, 64], sizes = [8, 32], strides = [1, 1]} : vector<8x96xf32> to vector<8x32xf32>
    %277 = vector.extract_strided_slice %259 {offsets = [0, 64], sizes = [8, 32], strides = [1, 1]} : vector<8x96xf32> to vector<8x32xf32>
    %278 = arith.addf %277, %19 : vector<8x32xf32>
    %279 = arith.mulf %267, %278 : vector<8x32xf32>
    %280 = arith.addf %276, %279 : vector<8x32xf32>
    %281 = math.tanh %280 : vector<8x32xf32>
    %cst_65 = arith.constant 1.000000e+00 : f32
    %282 = vector.broadcast %cst_65 : f32 to vector<8x32xf32>
    %283 = arith.subf %282, %275 : vector<8x32xf32>
    %284 = arith.mulf %283, %281 : vector<8x32xf32>
    %285 = arith.mulf %275, %219 : vector<8x32xf32>
    %286 = arith.addf %284, %285 : vector<8x32xf32>
    %287 = arith.index_cast %223 : i32 to index
    %c0_66 = arith.constant 0 : index
    %288 = vector.load %arg15[%287, %c0_66] : memref<64x32xf32, #tpu.memory_space<vmem>>, vector<8x32xf32>
    tpu.vector_store %arg15[%287, %c0_66], %286 {strides = array<i32>} : memref<64x32xf32, #tpu.memory_space<vmem>>, vector<8x32xf32>,
    %c4_i32 = arith.constant 4 : i32
    %c8_i32_67 = arith.constant 8 : i32
    %289 = arith.muli %c4_i32, %c8_i32_67 : i32
    %290 = tpu.assume_multiple %289, 8 : i32
    %291 = arith.index_cast %290 : i32 to index
    %c0_68 = arith.constant 0 : index
    %292 = vector.load %arg14[%291, %c0_68] : memref<64x96xf32, #tpu.memory_space<vmem>>, vector<8x96xf32>
    %293 = arith.truncf %254 : vector<8x32xf32> to vector<8x32xbf16>
    %cst_69 = arith.constant dense<0.000000e+00> : vector<8x96xf32>
    %294 = tpu.matmul %293, %8, %cst_69 {dimension_numbers = #tpu.dot_dimension_numbers<[1], [0], [0], [1], [0, 0, 1, 1], [], []>} : vector<8x32xbf16>, vector<32x96xbf16>, vector<8x96xf32> -> vector<8x96xf32>
    %295 = vector.extract_strided_slice %292 {offsets = [0, 0], sizes = [8, 32], strides = [1, 1]} : vector<8x96xf32> to vector<8x32xf32>
    %296 = vector.extract_strided_slice %294 {offsets = [0, 0], sizes = [8, 32], strides = [1, 1]} : vector<8x96xf32> to vector<8x32xf32>
    %297 = arith.addf %295, %296 : vector<8x32xf32>
    %298 = arith.negf %297 : vector<8x32xf32>
    %299 = math.exp %298 : vector<8x32xf32>
    %cst_70 = arith.constant 1.000000e+00 : f32
    %300 = vector.broadcast %cst_70 : f32 to vector<8x32xf32>
    %301 = arith.addf %300, %299 : vector<8x32xf32>
    %302 = arith.divf %300, %301 : vector<8x32xf32>
    %303 = vector.extract_strided_slice %292 {offsets = [0, 32], sizes = [8, 32], strides = [1, 1]} : vector<8x96xf32> to vector<8x32xf32>
    %304 = vector.extract_strided_slice %294 {offsets = [0, 32], sizes = [8, 32], strides = [1, 1]} : vector<8x96xf32> to vector<8x32xf32>
    %305 = arith.addf %303, %304 : vector<8x32xf32>
    %306 = arith.negf %305 : vector<8x32xf32>
    %307 = math.exp %306 : vector<8x32xf32>
    %cst_71 = arith.constant 1.000000e+00 : f32
    %308 = vector.broadcast %cst_71 : f32 to vector<8x32xf32>
    %309 = arith.addf %308, %307 : vector<8x32xf32>
    %310 = arith.divf %308, %309 : vector<8x32xf32>
    %311 = vector.extract_strided_slice %292 {offsets = [0, 64], sizes = [8, 32], strides = [1, 1]} : vector<8x96xf32> to vector<8x32xf32>
    %312 = vector.extract_strided_slice %294 {offsets = [0, 64], sizes = [8, 32], strides = [1, 1]} : vector<8x96xf32> to vector<8x32xf32>
    %313 = arith.addf %312, %16 : vector<8x32xf32>
    %314 = arith.mulf %302, %313 : vector<8x32xf32>
    %315 = arith.addf %311, %314 : vector<8x32xf32>
    %316 = math.tanh %315 : vector<8x32xf32>
    %cst_72 = arith.constant 1.000000e+00 : f32
    %317 = vector.broadcast %cst_72 : f32 to vector<8x32xf32>
    %318 = arith.subf %317, %310 : vector<8x32xf32>
    %319 = arith.mulf %318, %316 : vector<8x32xf32>
    %320 = arith.mulf %310, %254 : vector<8x32xf32>
    %321 = arith.addf %319, %320 : vector<8x32xf32>
    %322 = arith.truncf %321 : vector<8x32xf32> to vector<8x32xbf16>
    %cst_73 = arith.constant dense<0.000000e+00> : vector<8x96xf32>
    %323 = tpu.matmul %322, %9, %cst_73 {dimension_numbers = #tpu.dot_dimension_numbers<[1], [0], [0], [1], [0, 0, 1, 1], [], []>} : vector<8x32xbf16>, vector<32x96xbf16>, vector<8x96xf32> -> vector<8x96xf32>
    %324 = arith.addf %323, %13 : vector<8x96xf32>
    %325 = arith.truncf %286 : vector<8x32xf32> to vector<8x32xbf16>
    %cst_74 = arith.constant dense<0.000000e+00> : vector<8x96xf32>
    %326 = tpu.matmul %325, %10, %cst_74 {dimension_numbers = #tpu.dot_dimension_numbers<[1], [0], [0], [1], [0, 0, 1, 1], [], []>} : vector<8x32xbf16>, vector<32x96xbf16>, vector<8x96xf32> -> vector<8x96xf32>
    %327 = vector.extract_strided_slice %324 {offsets = [0, 0], sizes = [8, 32], strides = [1, 1]} : vector<8x96xf32> to vector<8x32xf32>
    %328 = vector.extract_strided_slice %326 {offsets = [0, 0], sizes = [8, 32], strides = [1, 1]} : vector<8x96xf32> to vector<8x32xf32>
    %329 = arith.addf %327, %328 : vector<8x32xf32>
    %330 = arith.negf %329 : vector<8x32xf32>
    %331 = math.exp %330 : vector<8x32xf32>
    %cst_75 = arith.constant 1.000000e+00 : f32
    %332 = vector.broadcast %cst_75 : f32 to vector<8x32xf32>
    %333 = arith.addf %332, %331 : vector<8x32xf32>
    %334 = arith.divf %332, %333 : vector<8x32xf32>
    %335 = vector.extract_strided_slice %324 {offsets = [0, 32], sizes = [8, 32], strides = [1, 1]} : vector<8x96xf32> to vector<8x32xf32>
    %336 = vector.extract_strided_slice %326 {offsets = [0, 32], sizes = [8, 32], strides = [1, 1]} : vector<8x96xf32> to vector<8x32xf32>
    %337 = arith.addf %335, %336 : vector<8x32xf32>
    %338 = arith.negf %337 : vector<8x32xf32>
    %339 = math.exp %338 : vector<8x32xf32>
    %cst_76 = arith.constant 1.000000e+00 : f32
    %340 = vector.broadcast %cst_76 : f32 to vector<8x32xf32>
    %341 = arith.addf %340, %339 : vector<8x32xf32>
    %342 = arith.divf %340, %341 : vector<8x32xf32>
    %343 = vector.extract_strided_slice %324 {offsets = [0, 64], sizes = [8, 32], strides = [1, 1]} : vector<8x96xf32> to vector<8x32xf32>
    %344 = vector.extract_strided_slice %326 {offsets = [0, 64], sizes = [8, 32], strides = [1, 1]} : vector<8x96xf32> to vector<8x32xf32>
    %345 = arith.addf %344, %19 : vector<8x32xf32>
    %346 = arith.mulf %334, %345 : vector<8x32xf32>
    %347 = arith.addf %343, %346 : vector<8x32xf32>
    %348 = math.tanh %347 : vector<8x32xf32>
    %cst_77 = arith.constant 1.000000e+00 : f32
    %349 = vector.broadcast %cst_77 : f32 to vector<8x32xf32>
    %350 = arith.subf %349, %342 : vector<8x32xf32>
    %351 = arith.mulf %350, %348 : vector<8x32xf32>
    %352 = arith.mulf %342, %286 : vector<8x32xf32>
    %353 = arith.addf %351, %352 : vector<8x32xf32>
    %354 = arith.index_cast %290 : i32 to index
    %c0_78 = arith.constant 0 : index
    %355 = vector.load %arg15[%354, %c0_78] : memref<64x32xf32, #tpu.memory_space<vmem>>, vector<8x32xf32>
    tpu.vector_store %arg15[%354, %c0_78], %353 {strides = array<i32>} : memref<64x32xf32, #tpu.memory_space<vmem>>, vector<8x32xf32>,
    %c5_i32 = arith.constant 5 : i32
    %c8_i32_79 = arith.constant 8 : i32
    %356 = arith.muli %c5_i32, %c8_i32_79 : i32
    %357 = tpu.assume_multiple %356, 8 : i32
    %358 = arith.index_cast %357 : i32 to index
    %c0_80 = arith.constant 0 : index
    %359 = vector.load %arg14[%358, %c0_80] : memref<64x96xf32, #tpu.memory_space<vmem>>, vector<8x96xf32>
    %360 = arith.truncf %321 : vector<8x32xf32> to vector<8x32xbf16>
    %cst_81 = arith.constant dense<0.000000e+00> : vector<8x96xf32>
    %361 = tpu.matmul %360, %8, %cst_81 {dimension_numbers = #tpu.dot_dimension_numbers<[1], [0], [0], [1], [0, 0, 1, 1], [], []>} : vector<8x32xbf16>, vector<32x96xbf16>, vector<8x96xf32> -> vector<8x96xf32>
    %362 = vector.extract_strided_slice %359 {offsets = [0, 0], sizes = [8, 32], strides = [1, 1]} : vector<8x96xf32> to vector<8x32xf32>
    %363 = vector.extract_strided_slice %361 {offsets = [0, 0], sizes = [8, 32], strides = [1, 1]} : vector<8x96xf32> to vector<8x32xf32>
    %364 = arith.addf %362, %363 : vector<8x32xf32>
    %365 = arith.negf %364 : vector<8x32xf32>
    %366 = math.exp %365 : vector<8x32xf32>
    %cst_82 = arith.constant 1.000000e+00 : f32
    %367 = vector.broadcast %cst_82 : f32 to vector<8x32xf32>
    %368 = arith.addf %367, %366 : vector<8x32xf32>
    %369 = arith.divf %367, %368 : vector<8x32xf32>
    %370 = vector.extract_strided_slice %359 {offsets = [0, 32], sizes = [8, 32], strides = [1, 1]} : vector<8x96xf32> to vector<8x32xf32>
    %371 = vector.extract_strided_slice %361 {offsets = [0, 32], sizes = [8, 32], strides = [1, 1]} : vector<8x96xf32> to vector<8x32xf32>
    %372 = arith.addf %370, %371 : vector<8x32xf32>
    %373 = arith.negf %372 : vector<8x32xf32>
    %374 = math.exp %373 : vector<8x32xf32>
    %cst_83 = arith.constant 1.000000e+00 : f32
    %375 = vector.broadcast %cst_83 : f32 to vector<8x32xf32>
    %376 = arith.addf %375, %374 : vector<8x32xf32>
    %377 = arith.divf %375, %376 : vector<8x32xf32>
    %378 = vector.extract_strided_slice %359 {offsets = [0, 64], sizes = [8, 32], strides = [1, 1]} : vector<8x96xf32> to vector<8x32xf32>
    %379 = vector.extract_strided_slice %361 {offsets = [0, 64], sizes = [8, 32], strides = [1, 1]} : vector<8x96xf32> to vector<8x32xf32>
    %380 = arith.addf %379, %16 : vector<8x32xf32>
    %381 = arith.mulf %369, %380 : vector<8x32xf32>
    %382 = arith.addf %378, %381 : vector<8x32xf32>
    %383 = math.tanh %382 : vector<8x32xf32>
    %cst_84 = arith.constant 1.000000e+00 : f32
    %384 = vector.broadcast %cst_84 : f32 to vector<8x32xf32>
    %385 = arith.subf %384, %377 : vector<8x32xf32>
    %386 = arith.mulf %385, %383 : vector<8x32xf32>
    %387 = arith.mulf %377, %321 : vector<8x32xf32>
    %388 = arith.addf %386, %387 : vector<8x32xf32>
    %389 = arith.truncf %388 : vector<8x32xf32> to vector<8x32xbf16>
    %cst_85 = arith.constant dense<0.000000e+00> : vector<8x96xf32>
    %390 = tpu.matmul %389, %9, %cst_85 {dimension_numbers = #tpu.dot_dimension_numbers<[1], [0], [0], [1], [0, 0, 1, 1], [], []>} : vector<8x32xbf16>, vector<32x96xbf16>, vector<8x96xf32> -> vector<8x96xf32>
    %391 = arith.addf %390, %13 : vector<8x96xf32>
    %392 = arith.truncf %353 : vector<8x32xf32> to vector<8x32xbf16>
    %cst_86 = arith.constant dense<0.000000e+00> : vector<8x96xf32>
    %393 = tpu.matmul %392, %10, %cst_86 {dimension_numbers = #tpu.dot_dimension_numbers<[1], [0], [0], [1], [0, 0, 1, 1], [], []>} : vector<8x32xbf16>, vector<32x96xbf16>, vector<8x96xf32> -> vector<8x96xf32>
    %394 = vector.extract_strided_slice %391 {offsets = [0, 0], sizes = [8, 32], strides = [1, 1]} : vector<8x96xf32> to vector<8x32xf32>
    %395 = vector.extract_strided_slice %393 {offsets = [0, 0], sizes = [8, 32], strides = [1, 1]} : vector<8x96xf32> to vector<8x32xf32>
    %396 = arith.addf %394, %395 : vector<8x32xf32>
    %397 = arith.negf %396 : vector<8x32xf32>
    %398 = math.exp %397 : vector<8x32xf32>
    %cst_87 = arith.constant 1.000000e+00 : f32
    %399 = vector.broadcast %cst_87 : f32 to vector<8x32xf32>
    %400 = arith.addf %399, %398 : vector<8x32xf32>
    %401 = arith.divf %399, %400 : vector<8x32xf32>
    %402 = vector.extract_strided_slice %391 {offsets = [0, 32], sizes = [8, 32], strides = [1, 1]} : vector<8x96xf32> to vector<8x32xf32>
    %403 = vector.extract_strided_slice %393 {offsets = [0, 32], sizes = [8, 32], strides = [1, 1]} : vector<8x96xf32> to vector<8x32xf32>
    %404 = arith.addf %402, %403 : vector<8x32xf32>
    %405 = arith.negf %404 : vector<8x32xf32>
    %406 = math.exp %405 : vector<8x32xf32>
    %cst_88 = arith.constant 1.000000e+00 : f32
    %407 = vector.broadcast %cst_88 : f32 to vector<8x32xf32>
    %408 = arith.addf %407, %406 : vector<8x32xf32>
    %409 = arith.divf %407, %408 : vector<8x32xf32>
    %410 = vector.extract_strided_slice %391 {offsets = [0, 64], sizes = [8, 32], strides = [1, 1]} : vector<8x96xf32> to vector<8x32xf32>
    %411 = vector.extract_strided_slice %393 {offsets = [0, 64], sizes = [8, 32], strides = [1, 1]} : vector<8x96xf32> to vector<8x32xf32>
    %412 = arith.addf %411, %19 : vector<8x32xf32>
    %413 = arith.mulf %401, %412 : vector<8x32xf32>
    %414 = arith.addf %410, %413 : vector<8x32xf32>
    %415 = math.tanh %414 : vector<8x32xf32>
    %cst_89 = arith.constant 1.000000e+00 : f32
    %416 = vector.broadcast %cst_89 : f32 to vector<8x32xf32>
    %417 = arith.subf %416, %409 : vector<8x32xf32>
    %418 = arith.mulf %417, %415 : vector<8x32xf32>
    %419 = arith.mulf %409, %353 : vector<8x32xf32>
    %420 = arith.addf %418, %419 : vector<8x32xf32>
    %421 = arith.index_cast %357 : i32 to index
    %c0_90 = arith.constant 0 : index
    %422 = vector.load %arg15[%421, %c0_90] : memref<64x32xf32, #tpu.memory_space<vmem>>, vector<8x32xf32>
    tpu.vector_store %arg15[%421, %c0_90], %420 {strides = array<i32>} : memref<64x32xf32, #tpu.memory_space<vmem>>, vector<8x32xf32>,
    %c6_i32 = arith.constant 6 : i32
    %c8_i32_91 = arith.constant 8 : i32
    %423 = arith.muli %c6_i32, %c8_i32_91 : i32
    %424 = tpu.assume_multiple %423, 8 : i32
    %425 = arith.index_cast %424 : i32 to index
    %c0_92 = arith.constant 0 : index
    %426 = vector.load %arg14[%425, %c0_92] : memref<64x96xf32, #tpu.memory_space<vmem>>, vector<8x96xf32>
    %427 = arith.truncf %388 : vector<8x32xf32> to vector<8x32xbf16>
    %cst_93 = arith.constant dense<0.000000e+00> : vector<8x96xf32>
    %428 = tpu.matmul %427, %8, %cst_93 {dimension_numbers = #tpu.dot_dimension_numbers<[1], [0], [0], [1], [0, 0, 1, 1], [], []>} : vector<8x32xbf16>, vector<32x96xbf16>, vector<8x96xf32> -> vector<8x96xf32>
    %429 = vector.extract_strided_slice %426 {offsets = [0, 0], sizes = [8, 32], strides = [1, 1]} : vector<8x96xf32> to vector<8x32xf32>
    %430 = vector.extract_strided_slice %428 {offsets = [0, 0], sizes = [8, 32], strides = [1, 1]} : vector<8x96xf32> to vector<8x32xf32>
    %431 = arith.addf %429, %430 : vector<8x32xf32>
    %432 = arith.negf %431 : vector<8x32xf32>
    %433 = math.exp %432 : vector<8x32xf32>
    %cst_94 = arith.constant 1.000000e+00 : f32
    %434 = vector.broadcast %cst_94 : f32 to vector<8x32xf32>
    %435 = arith.addf %434, %433 : vector<8x32xf32>
    %436 = arith.divf %434, %435 : vector<8x32xf32>
    %437 = vector.extract_strided_slice %426 {offsets = [0, 32], sizes = [8, 32], strides = [1, 1]} : vector<8x96xf32> to vector<8x32xf32>
    %438 = vector.extract_strided_slice %428 {offsets = [0, 32], sizes = [8, 32], strides = [1, 1]} : vector<8x96xf32> to vector<8x32xf32>
    %439 = arith.addf %437, %438 : vector<8x32xf32>
    %440 = arith.negf %439 : vector<8x32xf32>
    %441 = math.exp %440 : vector<8x32xf32>
    %cst_95 = arith.constant 1.000000e+00 : f32
    %442 = vector.broadcast %cst_95 : f32 to vector<8x32xf32>
    %443 = arith.addf %442, %441 : vector<8x32xf32>
    %444 = arith.divf %442, %443 : vector<8x32xf32>
    %445 = vector.extract_strided_slice %426 {offsets = [0, 64], sizes = [8, 32], strides = [1, 1]} : vector<8x96xf32> to vector<8x32xf32>
    %446 = vector.extract_strided_slice %428 {offsets = [0, 64], sizes = [8, 32], strides = [1, 1]} : vector<8x96xf32> to vector<8x32xf32>
    %447 = arith.addf %446, %16 : vector<8x32xf32>
    %448 = arith.mulf %436, %447 : vector<8x32xf32>
    %449 = arith.addf %445, %448 : vector<8x32xf32>
    %450 = math.tanh %449 : vector<8x32xf32>
    %cst_96 = arith.constant 1.000000e+00 : f32
    %451 = vector.broadcast %cst_96 : f32 to vector<8x32xf32>
    %452 = arith.subf %451, %444 : vector<8x32xf32>
    %453 = arith.mulf %452, %450 : vector<8x32xf32>
    %454 = arith.mulf %444, %388 : vector<8x32xf32>
    %455 = arith.addf %453, %454 : vector<8x32xf32>
    %456 = arith.truncf %455 : vector<8x32xf32> to vector<8x32xbf16>
    %cst_97 = arith.constant dense<0.000000e+00> : vector<8x96xf32>
    %457 = tpu.matmul %456, %9, %cst_97 {dimension_numbers = #tpu.dot_dimension_numbers<[1], [0], [0], [1], [0, 0, 1, 1], [], []>} : vector<8x32xbf16>, vector<32x96xbf16>, vector<8x96xf32> -> vector<8x96xf32>
    %458 = arith.addf %457, %13 : vector<8x96xf32>
    %459 = arith.truncf %420 : vector<8x32xf32> to vector<8x32xbf16>
    %cst_98 = arith.constant dense<0.000000e+00> : vector<8x96xf32>
    %460 = tpu.matmul %459, %10, %cst_98 {dimension_numbers = #tpu.dot_dimension_numbers<[1], [0], [0], [1], [0, 0, 1, 1], [], []>} : vector<8x32xbf16>, vector<32x96xbf16>, vector<8x96xf32> -> vector<8x96xf32>
    %461 = vector.extract_strided_slice %458 {offsets = [0, 0], sizes = [8, 32], strides = [1, 1]} : vector<8x96xf32> to vector<8x32xf32>
    %462 = vector.extract_strided_slice %460 {offsets = [0, 0], sizes = [8, 32], strides = [1, 1]} : vector<8x96xf32> to vector<8x32xf32>
    %463 = arith.addf %461, %462 : vector<8x32xf32>
    %464 = arith.negf %463 : vector<8x32xf32>
    %465 = math.exp %464 : vector<8x32xf32>
    %cst_99 = arith.constant 1.000000e+00 : f32
    %466 = vector.broadcast %cst_99 : f32 to vector<8x32xf32>
    %467 = arith.addf %466, %465 : vector<8x32xf32>
    %468 = arith.divf %466, %467 : vector<8x32xf32>
    %469 = vector.extract_strided_slice %458 {offsets = [0, 32], sizes = [8, 32], strides = [1, 1]} : vector<8x96xf32> to vector<8x32xf32>
    %470 = vector.extract_strided_slice %460 {offsets = [0, 32], sizes = [8, 32], strides = [1, 1]} : vector<8x96xf32> to vector<8x32xf32>
    %471 = arith.addf %469, %470 : vector<8x32xf32>
    %472 = arith.negf %471 : vector<8x32xf32>
    %473 = math.exp %472 : vector<8x32xf32>
    %cst_100 = arith.constant 1.000000e+00 : f32
    %474 = vector.broadcast %cst_100 : f32 to vector<8x32xf32>
    %475 = arith.addf %474, %473 : vector<8x32xf32>
    %476 = arith.divf %474, %475 : vector<8x32xf32>
    %477 = vector.extract_strided_slice %458 {offsets = [0, 64], sizes = [8, 32], strides = [1, 1]} : vector<8x96xf32> to vector<8x32xf32>
    %478 = vector.extract_strided_slice %460 {offsets = [0, 64], sizes = [8, 32], strides = [1, 1]} : vector<8x96xf32> to vector<8x32xf32>
    %479 = arith.addf %478, %19 : vector<8x32xf32>
    %480 = arith.mulf %468, %479 : vector<8x32xf32>
    %481 = arith.addf %477, %480 : vector<8x32xf32>
    %482 = math.tanh %481 : vector<8x32xf32>
    %cst_101 = arith.constant 1.000000e+00 : f32
    %483 = vector.broadcast %cst_101 : f32 to vector<8x32xf32>
    %484 = arith.subf %483, %476 : vector<8x32xf32>
    %485 = arith.mulf %484, %482 : vector<8x32xf32>
    %486 = arith.mulf %476, %420 : vector<8x32xf32>
    %487 = arith.addf %485, %486 : vector<8x32xf32>
    %488 = arith.index_cast %424 : i32 to index
    %c0_102 = arith.constant 0 : index
    %489 = vector.load %arg15[%488, %c0_102] : memref<64x32xf32, #tpu.memory_space<vmem>>, vector<8x32xf32>
    tpu.vector_store %arg15[%488, %c0_102], %487 {strides = array<i32>} : memref<64x32xf32, #tpu.memory_space<vmem>>, vector<8x32xf32>,
    %c7_i32 = arith.constant 7 : i32
    %c8_i32_103 = arith.constant 8 : i32
    %490 = arith.muli %c7_i32, %c8_i32_103 : i32
    %491 = tpu.assume_multiple %490, 8 : i32
    %492 = arith.index_cast %491 : i32 to index
    %c0_104 = arith.constant 0 : index
    %493 = vector.load %arg14[%492, %c0_104] : memref<64x96xf32, #tpu.memory_space<vmem>>, vector<8x96xf32>
    %494 = arith.truncf %455 : vector<8x32xf32> to vector<8x32xbf16>
    %cst_105 = arith.constant dense<0.000000e+00> : vector<8x96xf32>
    %495 = tpu.matmul %494, %8, %cst_105 {dimension_numbers = #tpu.dot_dimension_numbers<[1], [0], [0], [1], [0, 0, 1, 1], [], []>} : vector<8x32xbf16>, vector<32x96xbf16>, vector<8x96xf32> -> vector<8x96xf32>
    %496 = vector.extract_strided_slice %493 {offsets = [0, 0], sizes = [8, 32], strides = [1, 1]} : vector<8x96xf32> to vector<8x32xf32>
    %497 = vector.extract_strided_slice %495 {offsets = [0, 0], sizes = [8, 32], strides = [1, 1]} : vector<8x96xf32> to vector<8x32xf32>
    %498 = arith.addf %496, %497 : vector<8x32xf32>
    %499 = arith.negf %498 : vector<8x32xf32>
    %500 = math.exp %499 : vector<8x32xf32>
    %cst_106 = arith.constant 1.000000e+00 : f32
    %501 = vector.broadcast %cst_106 : f32 to vector<8x32xf32>
    %502 = arith.addf %501, %500 : vector<8x32xf32>
    %503 = arith.divf %501, %502 : vector<8x32xf32>
    %504 = vector.extract_strided_slice %493 {offsets = [0, 32], sizes = [8, 32], strides = [1, 1]} : vector<8x96xf32> to vector<8x32xf32>
    %505 = vector.extract_strided_slice %495 {offsets = [0, 32], sizes = [8, 32], strides = [1, 1]} : vector<8x96xf32> to vector<8x32xf32>
    %506 = arith.addf %504, %505 : vector<8x32xf32>
    %507 = arith.negf %506 : vector<8x32xf32>
    %508 = math.exp %507 : vector<8x32xf32>
    %cst_107 = arith.constant 1.000000e+00 : f32
    %509 = vector.broadcast %cst_107 : f32 to vector<8x32xf32>
    %510 = arith.addf %509, %508 : vector<8x32xf32>
    %511 = arith.divf %509, %510 : vector<8x32xf32>
    %512 = vector.extract_strided_slice %493 {offsets = [0, 64], sizes = [8, 32], strides = [1, 1]} : vector<8x96xf32> to vector<8x32xf32>
    %513 = vector.extract_strided_slice %495 {offsets = [0, 64], sizes = [8, 32], strides = [1, 1]} : vector<8x96xf32> to vector<8x32xf32>
    %514 = arith.addf %513, %16 : vector<8x32xf32>
    %515 = arith.mulf %503, %514 : vector<8x32xf32>
    %516 = arith.addf %512, %515 : vector<8x32xf32>
    %517 = math.tanh %516 : vector<8x32xf32>
    %cst_108 = arith.constant 1.000000e+00 : f32
    %518 = vector.broadcast %cst_108 : f32 to vector<8x32xf32>
    %519 = arith.subf %518, %511 : vector<8x32xf32>
    %520 = arith.mulf %519, %517 : vector<8x32xf32>
    %521 = arith.mulf %511, %455 : vector<8x32xf32>
    %522 = arith.addf %520, %521 : vector<8x32xf32>
    %523 = arith.truncf %522 : vector<8x32xf32> to vector<8x32xbf16>
    %cst_109 = arith.constant dense<0.000000e+00> : vector<8x96xf32>
    %524 = tpu.matmul %523, %9, %cst_109 {dimension_numbers = #tpu.dot_dimension_numbers<[1], [0], [0], [1], [0, 0, 1, 1], [], []>} : vector<8x32xbf16>, vector<32x96xbf16>, vector<8x96xf32> -> vector<8x96xf32>
    %525 = arith.addf %524, %13 : vector<8x96xf32>
    %526 = arith.truncf %487 : vector<8x32xf32> to vector<8x32xbf16>
    %cst_110 = arith.constant dense<0.000000e+00> : vector<8x96xf32>
    %527 = tpu.matmul %526, %10, %cst_110 {dimension_numbers = #tpu.dot_dimension_numbers<[1], [0], [0], [1], [0, 0, 1, 1], [], []>} : vector<8x32xbf16>, vector<32x96xbf16>, vector<8x96xf32> -> vector<8x96xf32>
    %528 = vector.extract_strided_slice %525 {offsets = [0, 0], sizes = [8, 32], strides = [1, 1]} : vector<8x96xf32> to vector<8x32xf32>
    %529 = vector.extract_strided_slice %527 {offsets = [0, 0], sizes = [8, 32], strides = [1, 1]} : vector<8x96xf32> to vector<8x32xf32>
    %530 = arith.addf %528, %529 : vector<8x32xf32>
    %531 = arith.negf %530 : vector<8x32xf32>
    %532 = math.exp %531 : vector<8x32xf32>
    %cst_111 = arith.constant 1.000000e+00 : f32
    %533 = vector.broadcast %cst_111 : f32 to vector<8x32xf32>
    %534 = arith.addf %533, %532 : vector<8x32xf32>
    %535 = arith.divf %533, %534 : vector<8x32xf32>
    %536 = vector.extract_strided_slice %525 {offsets = [0, 32], sizes = [8, 32], strides = [1, 1]} : vector<8x96xf32> to vector<8x32xf32>
    %537 = vector.extract_strided_slice %527 {offsets = [0, 32], sizes = [8, 32], strides = [1, 1]} : vector<8x96xf32> to vector<8x32xf32>
    %538 = arith.addf %536, %537 : vector<8x32xf32>
    %539 = arith.negf %538 : vector<8x32xf32>
    %540 = math.exp %539 : vector<8x32xf32>
    %cst_112 = arith.constant 1.000000e+00 : f32
    %541 = vector.broadcast %cst_112 : f32 to vector<8x32xf32>
    %542 = arith.addf %541, %540 : vector<8x32xf32>
    %543 = arith.divf %541, %542 : vector<8x32xf32>
    %544 = vector.extract_strided_slice %525 {offsets = [0, 64], sizes = [8, 32], strides = [1, 1]} : vector<8x96xf32> to vector<8x32xf32>
    %545 = vector.extract_strided_slice %527 {offsets = [0, 64], sizes = [8, 32], strides = [1, 1]} : vector<8x96xf32> to vector<8x32xf32>
    %546 = arith.addf %545, %19 : vector<8x32xf32>
    %547 = arith.mulf %535, %546 : vector<8x32xf32>
    %548 = arith.addf %544, %547 : vector<8x32xf32>
    %549 = math.tanh %548 : vector<8x32xf32>
    %cst_113 = arith.constant 1.000000e+00 : f32
    %550 = vector.broadcast %cst_113 : f32 to vector<8x32xf32>
    %551 = arith.subf %550, %543 : vector<8x32xf32>
    %552 = arith.mulf %551, %549 : vector<8x32xf32>
    %553 = arith.mulf %543, %487 : vector<8x32xf32>
    %554 = arith.addf %552, %553 : vector<8x32xf32>
    %555 = arith.index_cast %491 : i32 to index
    %c0_114 = arith.constant 0 : index
    %556 = vector.load %arg15[%555, %c0_114] : memref<64x32xf32, #tpu.memory_space<vmem>>, vector<8x32xf32>
    tpu.vector_store %arg15[%555, %c0_114], %554 {strides = array<i32>} : memref<64x32xf32, #tpu.memory_space<vmem>>, vector<8x32xf32>,
    %c8_i32_115 = arith.constant 8 : i32
    %c0_116 = arith.constant 0 : index
    %c0_117 = arith.constant 0 : index
    %c0_118 = arith.constant 0 : index
    %557 = vector.load %arg13[%c0_116, %c0_117, %c0_118] : memref<2x8x32xf32, #tpu.memory_space<vmem>>, vector<1x8x32xf32>
    %558 = vector.shape_cast %557 : vector<1x8x32xf32> to vector<8x32xf32>
    %559 = vector.shape_cast %522 : vector<8x32xf32> to vector<1x8x32xf32>
    tpu.vector_store %arg13[%c0_116, %c0_117, %c0_118], %559 {strides = array<i32>} : memref<2x8x32xf32, #tpu.memory_space<vmem>>, vector<1x8x32xf32>,
    %c1 = arith.constant 1 : index
    %c0_119 = arith.constant 0 : index
    %c0_120 = arith.constant 0 : index
    %560 = vector.load %arg13[%c1, %c0_119, %c0_120] : memref<2x8x32xf32, #tpu.memory_space<vmem>>, vector<1x8x32xf32>
    %561 = vector.shape_cast %560 : vector<1x8x32xf32> to vector<8x32xf32>
    %562 = vector.shape_cast %554 : vector<8x32xf32> to vector<1x8x32xf32>
    tpu.vector_store %arg13[%c1, %c0_119, %c0_120], %562 {strides = array<i32>} : memref<2x8x32xf32, #tpu.memory_space<vmem>>, vector<1x8x32xf32>,
    %c0_121 = arith.constant 0 : index
    %c0_122 = arith.constant 0 : index
    %563 = vector.load %arg15[%c0_121, %c0_122] : memref<64x32xf32, #tpu.memory_space<vmem>>, vector<64x32xf32>
    %564 = arith.truncf %563 : vector<64x32xf32> to vector<64x32xbf16>
    %c0_123 = arith.constant 0 : index
    %c0_124 = arith.constant 0 : index
    %565 = vector.load %arg10[%c0_123, %c0_124] : memref<32x128xbf16, #tpu.memory_space<vmem>>, vector<32x128xbf16>
    %cst_125 = arith.constant dense<0.000000e+00> : vector<64x128xf32>
    %566 = tpu.matmul %564, %565, %cst_125 {dimension_numbers = #tpu.dot_dimension_numbers<[1], [0], [0], [1], [0, 0, 1, 1], [], []>} : vector<64x32xbf16>, vector<32x128xbf16>, vector<64x128xf32> -> vector<64x128xf32>
    %c0_126 = arith.constant 0 : index
    %c0_127 = arith.constant 0 : index
    %567 = vector.load %arg11[%c0_126, %c0_127] : memref<1x128xf32, #tpu.memory_space<vmem>>, vector<1x128xf32>
    %568 = vector.broadcast %567 : vector<1x128xf32> to vector<64x128xf32>
    %569 = arith.addf %566, %568 : vector<64x128xf32>
    %570 = tpu.iota {dimensions = array<i32: 1>} : vector<64x128xi32>
    %c16_i32 = arith.constant 16 : i32
    %571 = vector.broadcast %c16_i32 : i32 to vector<64x128xi32>
    %572 = arith.cmpi sge, %570, %571 : vector<64x128xi32>
    %c20_i32 = arith.constant 20 : i32
    %573 = vector.broadcast %c20_i32 : i32 to vector<64x128xi32>
    %574 = arith.cmpi slt, %570, %573 : vector<64x128xi32>
    %575 = arith.andi %572, %574 : vector<64x128xi1>
    %576 = math.tanh %569 : vector<64x128xf32>
    %577 = arith.select %575, %576, %569 : vector<64x128xi1>, vector<64x128xf32>
    %c0_128 = arith.constant 0 : index
    %c0_129 = arith.constant 0 : index
    %578 = vector.load %arg12[%c0_128, %c0_129] : memref<64x128xf32, #tpu.memory_space<vmem>>, vector<64x128xf32>
    tpu.vector_store %arg12[%c0_128, %c0_129], %577 {strides = array<i32>} : memref<64x128xf32, #tpu.memory_space<vmem>>, vector<64x128xf32>,
    return
  }
  func.func @transform_0(%arg0: i32) -> (i32, i32) {
    %c0_i32 = arith.constant 0 : i32
    %c0_i32_0 = arith.constant 0 : i32
    %c0_i32_1 = arith.constant 0 : i32
    return %c0_i32, %c0_i32_0 : i32, i32
  }
  func.func @transform_1(%arg0: i32) -> (i32, i32) {
    %c0_i32 = arith.constant 0 : i32
    %c0_i32_0 = arith.constant 0 : i32
    %c0_i32_1 = arith.constant 0 : i32
    return %c0_i32, %c0_i32_0 : i32, i32
  }
  func.func @transform_2(%arg0: i32) -> (i32, i32) {
    %c0_i32 = arith.constant 0 : i32
    %c0_i32_0 = arith.constant 0 : i32
    %c0_i32_1 = arith.constant 0 : i32
    return %c0_i32, %c0_i32_0 : i32, i32
  }
  func.func @transform_3(%arg0: i32) -> (i32, i32) {
    %c0_i32 = arith.constant 0 : i32
    %c0_i32_0 = arith.constant 0 : i32
    %c0_i32_1 = arith.constant 0 : i32
    return %c0_i32, %c0_i32_0 : i32, i32
  }
  func.func @transform_4(%arg0: i32) -> (i32, i32) {
    %c0_i32 = arith.constant 0 : i32
    %c0_i32_0 = arith.constant 0 : i32
    %c0_i32_1 = arith.constant 0 : i32
    return %c0_i32, %c0_i32_0 : i32, i32
  }
  func.func @transform_5(%arg0: i32) -> (i32, i32) {
    %c0_i32 = arith.constant 0 : i32
    %c0_i32_0 = arith.constant 0 : i32
    %c0_i32_1 = arith.constant 0 : i32
    return %c0_i32, %c0_i32_0 : i32, i32
  }
  func.func @transform_6(%arg0: i32) -> (i32, i32) {
    %c0_i32 = arith.constant 0 : i32
    %c0_i32_0 = arith.constant 0 : i32
    %c0_i32_1 = arith.constant 0 : i32
    return %c0_i32, %c0_i32_0 : i32, i32
  }
  func.func @transform_7(%arg0: i32) -> (i32, i32) {
    %c0_i32 = arith.constant 0 : i32
    %c0_i32_0 = arith.constant 0 : i32
    %c0_i32_1 = arith.constant 0 : i32
    return %c0_i32, %c0_i32_0 : i32, i32
  }
  func.func @transform_8(%arg0: i32) -> (i32, i32) {
    %c0_i32 = arith.constant 0 : i32
    %c0_i32_0 = arith.constant 0 : i32
    %c0_i32_1 = arith.constant 0 : i32
    return %c0_i32, %c0_i32_0 : i32, i32
  }
  func.func @transform_9(%arg0: i32) -> (i32, i32) {
    %c0_i32 = arith.constant 0 : i32
    %c0_i32_0 = arith.constant 0 : i32
    %c0_i32_1 = arith.constant 0 : i32
    return %c0_i32, %c0_i32_0 : i32, i32
  }
  func.func @transform_10(%arg0: i32) -> (i32, i32) {
    %c0_i32 = arith.constant 0 : i32
    %c0_i32_0 = arith.constant 0 : i32
    %c0_i32_1 = arith.constant 0 : i32
    return %c0_i32, %c0_i32_0 : i32, i32
  }
  func.func @transform_11(%arg0: i32) -> (i32, i32) {
    %c0_i32 = arith.constant 0 : i32
    %c0_i32_0 = arith.constant 0 : i32
    %c0_i32_1 = arith.constant 0 : i32
    return %c0_i32, %c0_i32_0 : i32, i32
  }
  func.func @transform_12(%arg0: i32) -> (i32, i32, i32) {
    %c0_i32 = arith.constant 0 : i32
    %c0_i32_0 = arith.constant 0 : i32
    %c0_i32_1 = arith.constant 0 : i32
    %c0_i32_2 = arith.constant 0 : i32
    return %c0_i32, %c0_i32_0, %c0_i32_1 : i32, i32, i32
  }
}

</mosaic_0001>

<llo_original>
// kernel: tpu_custom_call.1
$region0: #{tpu_custom_call.1}
  #allocation0 [shape = 'u32[]', space=smem, size = 0x4, offset = 0x4, fixed_abs, tag = 'smem constant byte address 0x4 - core index']
  #allocation1 [shape = 'u32[144,128]{1,0:T(1,128)}', space=vmem, size = 0x12000, scoped, tag = 'internal scratch']
  #allocation2 [shape = 'f32[64,96]{1,0:T(8,128)}', space=vmem, size = 0x8000, scoped, tag = 'scratch operand']
  #allocation3 [shape = 'f32[64,32]{1,0:T(8,128)}', space=vmem, size = 0x8000, scoped, tag = 'scratch operand']
  %s0 = inlined_call_operand.vmem [shape: f32[64,3], index: 0, kind: input, shape index: {}]
  %s1 = inlined_call_operand.vmem [shape: bf16[3,96], index: 1, kind: input, shape index: {}]
  %s2 = inlined_call_operand.vmem [shape: bf16[32,96], index: 2, kind: input, shape index: {}]
  %s3 = inlined_call_operand.vmem [shape: f32[1,96], index: 3, kind: input, shape index: {}]
  %s4 = inlined_call_operand.vmem [shape: f32[1,32], index: 4, kind: input, shape index: {}]
  %s5 = inlined_call_operand.vmem [shape: bf16[32,96], index: 5, kind: input, shape index: {}]
  %s6 = inlined_call_operand.vmem [shape: bf16[32,96], index: 6, kind: input, shape index: {}]
  %s7 = inlined_call_operand.vmem [shape: f32[1,96], index: 7, kind: input, shape index: {}]
  %s8 = inlined_call_operand.vmem [shape: f32[1,32], index: 8, kind: input, shape index: {}]
  %s9 = inlined_call_operand.vmem [shape: bf16[32,128], index: 9, kind: input, shape index: {}]
  %s10 = inlined_call_operand.vmem [shape: f32[1,128], index: 10, kind: input, shape index: {}]
  %s11 = inlined_call_operand.hbm [shape: f32[64,128], index: 11, kind: output, shape index: {0}]
  %s12 = inlined_call_operand.hbm [shape: f32[2,8,32], index: 12, kind: output, shape index: {1}]
  %13 = xla_tuple %s11, %s12
  %s14 = sld [smem:[#allocation0]]
  $region62: #{tpu_custom_call.1} parent=0
    _
  %s16 = ssub.s32 1, %s14
  %s17 = scalar_select 0, %s16, %s14
  $region1: #{tpu_custom_call.1} parent=0
    #allocation4 [shape = 'u8[32768]{0}', space=vmem, size = 0x8000, scoped, tag = 'output window, operand 0, single buffered']
    #allocation5 [shape = 's32[1]{0}', space=sflag, size = 0x4, scoped, tag = 'scoped memory for tpu_custom_call.1']
    #allocation6 [shape = 'u8[8192]{0}', space=vmem, size = 0x2000, scoped, tag = 'output window, operand 1, single buffered']
    #allocation7 [shape = 's32[1]{0}', space=sflag, size = 0x4, scoped, tag = 'scoped memory for tpu_custom_call.1']
    %18 = vsyncpa [#allocation5], 0
    %19 = vsyncpa [#allocation7], 0
    // Predicated region
    $region2: #{tpu_custom_call.1} parent=1 // pred_check
      _
    $region3: #{tpu_custom_call.1} parent=1 // pred_check_branch
      %21 = sbr.rel (0) target = $region5
    $region4: #{tpu_custom_call.1} parent=1 // pred_region
      _
    $region5: #{tpu_custom_call.1} parent=1 // pred_fallthru
      _
    // Predicated region
    $region6: #{tpu_custom_call.1} parent=1 // pred_check
      _
    $region7: #{tpu_custom_call.1} parent=1 // pred_check_branch
      %23 = sbr.rel (0) target = $region9
    $region8: #{tpu_custom_call.1} parent=1 // pred_region
      _
    $region9: #{tpu_custom_call.1} parent=1 // pred_fallthru
      _
    // Predicated region
    $region10: #{tpu_custom_call.1} parent=1 // pred_check
      _
    $region11: #{tpu_custom_call.1} parent=1 // pred_check_branch
      %25 = sbr.rel (0) target = $region13
    $region12: #{tpu_custom_call.1} parent=1 // pred_region
      _
    $region13: #{tpu_custom_call.1} parent=1 // pred_fallthru
      _
    // Predicated region
    $region14: #{tpu_custom_call.1} parent=1 // pred_check
      _
    $region15: #{tpu_custom_call.1} parent=1 // pred_check_branch
      %27 = sbr.rel (0) target = $region17
    $region16: #{tpu_custom_call.1} parent=1 // pred_region
      _
    $region17: #{tpu_custom_call.1} parent=1 // pred_fallthru
      _
    // Predicated region
    $region18: #{tpu_custom_call.1} parent=1 // pred_check
      _
    $region19: #{tpu_custom_call.1} parent=1 // pred_check_branch
      %29 = sbr.rel (0) target = $region21
    $region20: #{tpu_custom_call.1} parent=1 // pred_region
      _
    $region21: #{tpu_custom_call.1} parent=1 // pred_fallthru
      _
    // Predicated region
    $region22: #{tpu_custom_call.1} parent=1 // pred_check
      _
    $region23: #{tpu_custom_call.1} parent=1 // pred_check_branch
      %31 = sbr.rel (0) target = $region25
    $region24: #{tpu_custom_call.1} parent=1 // pred_region
      _
    $region25: #{tpu_custom_call.1} parent=1 // pred_fallthru
      _
    // Predicated region
    $region26: #{tpu_custom_call.1} parent=1 // pred_check
      _
    $region27: #{tpu_custom_call.1} parent=1 // pred_check_branch
      %33 = sbr.rel (0) target = $region29
    $region28: #{tpu_custom_call.1} parent=1 // pred_region
      _
    $region29: #{tpu_custom_call.1} parent=1 // pred_fallthru
      _
    // Predicated region
    $region30: #{tpu_custom_call.1} parent=1 // pred_check
      _
    $region31: #{tpu_custom_call.1} parent=1 // pred_check_branch
      %35 = sbr.rel (0) target = $region33
    $region32: #{tpu_custom_call.1} parent=1 // pred_region
      _
    $region33: #{tpu_custom_call.1} parent=1 // pred_fallthru
      _
    // Predicated region
    $region34: #{tpu_custom_call.1} parent=1 // pred_check
      _
    $region35: #{tpu_custom_call.1} parent=1 // pred_check_branch
      %37 = sbr.rel (0) target = $region37
    $region36: #{tpu_custom_call.1} parent=1 // pred_region
      _
    $region37: #{tpu_custom_call.1} parent=1 // pred_fallthru
      _
    // Predicated region
    $region38: #{tpu_custom_call.1} parent=1 // pred_check
      _
    $region39: #{tpu_custom_call.1} parent=1 // pred_check_branch
      %39 = sbr.rel (0) target = $region41
    $region40: #{tpu_custom_call.1} parent=1 // pred_region
      _
    $region41: #{tpu_custom_call.1} parent=1 // pred_fallthru
      _
    // Predicated region
    $region42: #{tpu_custom_call.1} parent=1 // pred_check
      _
    $region43: #{tpu_custom_call.1} parent=1 // pred_check_branch
      %41 = sbr.rel (0) target = $region45
    $region44: #{tpu_custom_call.1} parent=1 // pred_region
      _
    $region45: #{tpu_custom_call.1} parent=1 // pred_fallthru
      _
    %v43 = vld [vmem:[%s0] sm:$0xff]
    %v44 = vld [vmem:[%s0 + $0x8] sm:$0xff]
    %v45 = vld [vmem:[%s0 + $0x10] sm:$0xff]
    %v46 = vld [vmem:[%s0 + $0x18] sm:$0xff]
    %v47 = vld [vmem:[%s0 + $0x20] sm:$0xff]
    %v48 = vld [vmem:[%s0 + $0x28] sm:$0xff]
    %v49 = vld [vmem:[%s0 + $0x30] sm:$0xff]
    %v50 = vld [vmem:[%s0 + $0x38] sm:$0xff]
    %v51 = vpack.c.bf16 %v44, %v43
    %v52 = vpack.c.bf16 %v46, %v45
    %v53 = vpack.c.bf16 %v48, %v47
    %v54 = vpack.c.bf16 %v50, %v49
    %v55 = vld [vmem:[%s1] sm:$0x3]
    %v56 = vld [vmem:[%s3] sm:$0x1]
    %v58 = vlaneseq
    %v59 = vshrl.u32 %v58, 7
    %v60 = vsub.s32 0, %v59
    %v61 = vrot.slane %v56, %v60
    %vm63 = vcmask 23552
    %v65 = vsel %vm63, %v51, 0
    %v68 = vsel %vm63, %v52, 0
    %v71 = vsel %vm63, %v53, 0
    %v74 = vsel %vm63, %v54, 0
    %vm76 = vcmask 1040384
    %vm77 = vcmask 1041408
    %v78 = vsel %vm76, 4294967295, 65535
    %v79 = vsel %vm77, %v78, 0
    %v81 = vand.u32 %v55, %v79
    %83 = vmatprep.subr.bf16.mxu0 0
    %84 = vmatpush1.bf16.msra.mxu0 0
    %85 = vmatprep.subr.bf16.mxu0 0
    %86 = vmatpush1.bf16.msra.mxu0 0
    %87 = vmatprep.subr.bf16.mxu0 0
    %88 = vmatpush1.bf16.msra.mxu0 0
    %89 = vmatprep.subr.bf16.mxu0 0
    %90 = vmatpush1.bf16.msra.mxu0 0
    %91 = vmatprep.subr.bf16.mxu0 0
    %92 = vmatpush1.bf16.msra.mxu0 0
    %93 = vmatprep.subr.bf16.mxu0 0
    %94 = vmatpush1.bf16.msra.mxu0 0
    %95 = vmatprep.subr.bf16.mxu0 0
    %96 = vmatpush1.bf16.msra.mxu0 0
    %97 = vmatprep.subr.bf16.mxu0 0
    %98 = vmatpush1.bf16.msra.mxu0 %v81
    %99 = vmatprep.subr.bf16.mxu0 0
    %100 = vmatpush2.bf16.msra.mxu0 0
    %101 = vmatprep.subr.bf16.mxu0 0
    %102 = vmatpush2.bf16.msra.mxu0 0
    %103 = vmatprep.subr.bf16.mxu0 0
    %104 = vmatpush2.bf16.msra.mxu0 0
    %105 = vmatprep.subr.bf16.mxu0 0
    %106 = vmatpush2.bf16.msra.mxu0 0
    %107 = vmatprep.subr.bf16.mxu0 0
    %108 = vmatpush2.bf16.msra.mxu0 0
    %109 = vmatprep.subr.bf16.mxu0 0
    %110 = vmatpush2.bf16.msra.mxu0 0
    %111 = vmatprep.subr.bf16.mxu0 0
    %112 = vmatpush2.bf16.msra.mxu0 0
    %113 = vmatprep.subr.bf16.mxu0 0
    %114 = vmatpush2.bf16.msra.mxu0 0
    %115 = vmatprep.mubr.bf16.mxu0 0
    %116 = vmatmul.mubr.bf16.gmra.mxu0 %v65
    %v117 = vpop.f32.mrf.mxu0
    %v118 = vadd.f32 %v61, %v117
    %v119 = vpop.f32.mrf.mxu0
    %v120 = vpop.f32.mrf.mxu0
    %v121 = vadd.f32 %v61, %v120
    %v122 = vpop.f32.mrf.mxu0
    %123 = vmatprep.mubr.bf16.mxu0 0
    %124 = vmatmul.mubr.bf16.gmra.mxu0 %v68
    %v125 = vpop.f32.mrf.mxu0
    %v126 = vadd.f32 %v61, %v125
    %v127 = vpop.f32.mrf.mxu0
    %v128 = vpop.f32.mrf.mxu0
    %v129 = vadd.f32 %v61, %v128
    %v130 = vpop.f32.mrf.mxu0
    %131 = vmatprep.mubr.bf16.mxu0 0
    %132 = vmatmul.mubr.bf16.gmra.mxu0 %v71
    %v133 = vpop.f32.mrf.mxu0
    %v134 = vadd.f32 %v61, %v133
    %v135 = vpop.f32.mrf.mxu0
    %v136 = vpop.f32.mrf.mxu0
    %v137 = vadd.f32 %v61, %v136
    %v138 = vpop.f32.mrf.mxu0
    %139 = vmatprep.mubr.bf16.mxu0 0
    %140 = vmatmul.mubr.bf16.gmra.mxu0 %v74
    %v141 = vpop.f32.mrf.mxu0
    %v142 = vadd.f32 %v61, %v141
    %v143 = vpop.f32.mrf.mxu0
    %v144 = vpop.f32.mrf.mxu0
    %v145 = vadd.f32 %v61, %v144
    %v146 = vpop.f32.mrf.mxu0
    %147 = vdwg.mxu0
    %vm148 = vcmask 785408
    %149 = vst.msk [vmem:[#allocation2] sm:$0xff] %vm148, %v118
    %150 = vst.msk [vmem:[#allocation2 + $0x8] sm:$0xff] %vm148, %v121
    %151 = vst.msk [vmem:[#allocation2 + $0x10] sm:$0xff] %vm148, %v126
    %152 = vst.msk [vmem:[#allocation2 + $0x18] sm:$0xff] %vm148, %v129
    %153 = vst.msk [vmem:[#allocation2 + $0x20] sm:$0xff] %vm148, %v134
    %154 = vst.msk [vmem:[#allocation2 + $0x28] sm:$0xff] %vm148, %v137
    %155 = vst.msk [vmem:[#allocation2 + $0x30] sm:$0xff] %vm148, %v142
    %156 = vst.msk [vmem:[#allocation2 + $0x38] sm:$0xff] %vm148, %v145
    %v157 = vld [vmem:[%s2] sm:$0xf]
    %v158 = vld [vmem:[%s2 + $0x4] sm:$0xf]
    %v159 = vld [vmem:[%s2 + $0x8] sm:$0xf]
    %v160 = vld [vmem:[%s2 + $0xc] sm:$0xf]
    %v161 = vld [vmem:[%s5] sm:$0xf]
    %v162 = vld [vmem:[%s5 + $0x4] sm:$0xf]
    %v163 = vld [vmem:[%s5 + $0x8] sm:$0xf]
    %v164 = vld [vmem:[%s5 + $0xc] sm:$0xf]
    %v165 = vld [vmem:[%s6] sm:$0xf]
    %v166 = vld [vmem:[%s6 + $0x4] sm:$0xf]
    %v167 = vld [vmem:[%s6 + $0x8] sm:$0xf]
    %v168 = vld [vmem:[%s6 + $0xc] sm:$0xf]
    %v169 = vld [vmem:[%s7] sm:$0x1]
    %v171 = vlaneseq
    %v172 = vshrl.u32 %v171, 7
    %v173 = vsub.s32 0, %v172
    %v174 = vrot.slane %v169, %v173
    %v176 = vld [vmem:[%s4] sm:$0x1]
    %v178 = vlaneseq
    %v179 = vshrl.u32 %v178, 7
    %v180 = vsub.s32 0, %v179
    %v181 = vrot.slane %v176, %v180
    %v182 = vld [vmem:[%s8] sm:$0x1]
    %v184 = vlaneseq
    %v185 = vshrl.u32 %v184, 7
    %v186 = vsub.s32 0, %v185
    %v187 = vrot.slane %v182, %v186
    %v188 = vld [vmem:[#allocation2] sm:$0xff]
    %v193 = vunpack.c.l.b16 %v157
    %v194 = vunpack.c.l.b16 %v158
    %v195 = vunpack.c.l.b16 %v159
    %v196 = vunpack.c.l.b16 %v160
    %v197 = vpack.c.b16 %v194, %v193
    %v198 = vpack.c.b16 %v196, %v195
    %vm201 = vcmask 261120
    %v203 = vsel %vm201, 0, 0
    %205 = vmatprep.subr.bf16.mxu0 0
    %206 = vmatpush1.bf16.msra.mxu0 0
    %207 = vmatprep.subr.bf16.mxu0 0
    %208 = vmatpush1.bf16.msra.mxu0 0
    %209 = vmatprep.subr.bf16.mxu0 0
    %210 = vmatpush1.bf16.msra.mxu0 0
    %211 = vmatprep.subr.bf16.mxu0 0
    %212 = vmatpush1.bf16.msra.mxu0 0
    %213 = vmatprep.subr.bf16.mxu0 0
    %214 = vmatpush1.bf16.msra.mxu0 0
    %215 = vmatprep.subr.bf16.mxu0 0
    %216 = vmatpush1.bf16.msra.mxu0 0
    %217 = vmatprep.subr.bf16.mxu0 0
    %218 = vmatpush1.bf16.msra.mxu0 %v198
    %219 = vmatprep.subr.bf16.mxu0 0
    %220 = vmatpush1.bf16.msra.mxu0 %v197
    %221 = vmatprep.subr.bf16.mxu0 0
    %222 = vmatpush2.bf16.msra.mxu0 0
    %223 = vmatprep.subr.bf16.mxu0 0
    %224 = vmatpush2.bf16.msra.mxu0 0
    %225 = vmatprep.subr.bf16.mxu0 0
    %226 = vmatpush2.bf16.msra.mxu0 0
    %227 = vmatprep.subr.bf16.mxu0 0
    %228 = vmatpush2.bf16.msra.mxu0 0
    %229 = vmatprep.subr.bf16.mxu0 0
    %230 = vmatpush2.bf16.msra.mxu0 0
    %231 = vmatprep.subr.bf16.mxu0 0
    %232 = vmatpush2.bf16.msra.mxu0 0
    %233 = vmatprep.subr.bf16.mxu0 0
    %234 = vmatpush2.bf16.msra.mxu0 0
    %235 = vmatprep.subr.bf16.mxu0 0
    %236 = vmatpush2.bf16.msra.mxu0 0
    %237 = vmatprep.mubr.bf16.mxu0 0
    %238 = vmatmul.mubr.bf16.gmra.mxu0 %v203
    %v239 = vpop.f32.mrf.mxu0
    %v240 = vadd.f32 0.0, %v239
    %v241 = vpop.f32.mrf.mxu0
    %v242 = vpop.f32.mrf.mxu0
    %v243 = vpop.f32.mrf.mxu0
    %244 = vdwg.mxu0
    %v245 = vadd.f32 %v188, %v240
    %v246 = vxor.u32 %v245, 2147483648
    %v247 = vmul.f32 %v246, 1.442695
    %v248 = vpow.pop %v247
    %v249 = vadd.f32 %v248, 1.0
    %v250 = vrcp.pop %v249
    %v251 = vmul.f32 1.0, %v250
    %252 = vrot.lane.b32.xlu0 %v181, 64
    %v253 = vpop.permute.xlu0 %252
    %v255 = vadd.f32 %v240, %v253
    %257 = vrot.lane.b32.xlu0 %v255, 64
    %v258 = vpop.permute.xlu0 %257
    %v260 = vmul.f32 %v251, %v258
    %262 = vrot.lane.b32.xlu0 %v260, 64
    %v263 = vpop.permute.xlu0 %262
    %v265 = vadd.f32 %v188, %v263
    %v266 = vtanh.pop %v265
    %v267 = vsub.f32 1.0, %v251
    %269 = vrot.lane.b32.xlu0 %v266, 96
    %v270 = vpop.permute.xlu0 %269
    %v272 = vmul.f32 %v267, %v270
    %v273 = vmul.f32 %v251, 0.0
    %v274 = vadd.f32 %v272, %v273
    %v275 = vpack.c.bf16 %v274, %v274
    %277 = vrot.lane.b32.xlu0 %v275, 96
    %v278 = vpop.permute.xlu0 %277
    %v283 = vunpack.c.l.b16 %v161
    %v284 = vunpack.c.l.b16 %v162
    %v285 = vunpack.c.l.b16 %v163
    %v286 = vunpack.c.l.b16 %v164
    %v287 = vpack.c.b16 %v284, %v283
    %v288 = vpack.c.b16 %v286, %v285
    %v292 = vsel %vm201, %v278, 0
    %294 = vmatprep.subr.bf16.mxu0 0
    %295 = vmatpush1.bf16.msra.mxu0 0
    %296 = vmatprep.subr.bf16.mxu0 0
    %297 = vmatpush1.bf16.msra.mxu0 0
    %298 = vmatprep.subr.bf16.mxu0 0
    %299 = vmatpush1.bf16.msra.mxu0 0
    %300 = vmatprep.subr.bf16.mxu0 0
    %301 = vmatpush1.bf16.msra.mxu0 0
    %302 = vmatprep.subr.bf16.mxu0 0
    %303 = vmatpush1.bf16.msra.mxu0 0
    %304 = vmatprep.subr.bf16.mxu0 0
    %305 = vmatpush1.bf16.msra.mxu0 0
    %306 = vmatprep.subr.bf16.mxu0 0
    %307 = vmatpush1.bf16.msra.mxu0 %v288
    %308 = vmatprep.subr.bf16.mxu0 0
    %309 = vmatpush1.bf16.msra.mxu0 %v287
    %310 = vmatprep.subr.bf16.mxu0 0
    %311 = vmatpush2.bf16.msra.mxu0 0
    %312 = vmatprep.subr.bf16.mxu0 0
    %313 = vmatpush2.bf16.msra.mxu0 0
    %314 = vmatprep.subr.bf16.mxu0 0
    %315 = vmatpush2.bf16.msra.mxu0 0
    %316 = vmatprep.subr.bf16.mxu0 0
    %317 = vmatpush2.bf16.msra.mxu0 0
    %318 = vmatprep.subr.bf16.mxu0 0
    %319 = vmatpush2.bf16.msra.mxu0 0
    %320 = vmatprep.subr.bf16.mxu0 0
    %321 = vmatpush2.bf16.msra.mxu0 0
    %322 = vmatprep.subr.bf16.mxu0 0
    %323 = vmatpush2.bf16.msra.mxu0 0
    %324 = vmatprep.subr.bf16.mxu0 0
    %325 = vmatpush2.bf16.msra.mxu0 0
    %326 = vmatprep.mubr.bf16.mxu0 0
    %327 = vmatmul.mubr.bf16.gmra.mxu0 %v292
    %v328 = vpop.f32.mrf.mxu0
    %v329 = vadd.f32 %v174, %v328
    %v330 = vpop.f32.mrf.mxu0
    %v331 = vpop.f32.mrf.mxu0
    %v332 = vpop.f32.mrf.mxu0
    %333 = vdwg.mxu0
    %v338 = vunpack.c.l.b16 %v165
    %v339 = vunpack.c.l.b16 %v166
    %v340 = vunpack.c.l.b16 %v167
    %v341 = vunpack.c.l.b16 %v168
    %v342 = vpack.c.b16 %v339, %v338
    %v343 = vpack.c.b16 %v341, %v340
    %346 = vmatprep.subr.bf16.mxu0 0
    %347 = vmatpush1.bf16.msra.mxu0 0
    %348 = vmatprep.subr.bf16.mxu0 0
    %349 = vmatpush1.bf16.msra.mxu0 0
    %350 = vmatprep.subr.bf16.mxu0 0
    %351 = vmatpush1.bf16.msra.mxu0 0
    %352 = vmatprep.subr.bf16.mxu0 0
    %353 = vmatpush1.bf16.msra.mxu0 0
    %354 = vmatprep.subr.bf16.mxu0 0
    %355 = vmatpush1.bf16.msra.mxu0 0
    %356 = vmatprep.subr.bf16.mxu0 0
    %357 = vmatpush1.bf16.msra.mxu0 0
    %358 = vmatprep.subr.bf16.mxu0 0
    %359 = vmatpush1.bf16.msra.mxu0 %v343
    %360 = vmatprep.subr.bf16.mxu0 0
    %361 = vmatpush1.bf16.msra.mxu0 %v342
    %362 = vmatprep.subr.bf16.mxu0 0
    %363 = vmatpush2.bf16.msra.mxu0 0
    %364 = vmatprep.subr.bf16.mxu0 0
    %365 = vmatpush2.bf16.msra.mxu0 0
    %366 = vmatprep.subr.bf16.mxu0 0
    %367 = vmatpush2.bf16.msra.mxu0 0
    %368 = vmatprep.subr.bf16.mxu0 0
    %369 = vmatpush2.bf16.msra.mxu0 0
    %370 = vmatprep.subr.bf16.mxu0 0
    %371 = vmatpush2.bf16.msra.mxu0 0
    %372 = vmatprep.subr.bf16.mxu0 0
    %373 = vmatpush2.bf16.msra.mxu0 0
    %374 = vmatprep.subr.bf16.mxu0 0
    %375 = vmatpush2.bf16.msra.mxu0 0
    %376 = vmatprep.subr.bf16.mxu0 0
    %377 = vmatpush2.bf16.msra.mxu0 0
    %378 = vmatprep.mubr.bf16.mxu0 0
    %379 = vmatmul.mubr.bf16.gmra.mxu0 %v203
    %v380 = vpop.f32.mrf.mxu0
    %v381 = vadd.f32 0.0, %v380
    %v382 = vpop.f32.mrf.mxu0
    %v383 = vpop.f32.mrf.mxu0
    %v384 = vpop.f32.mrf.mxu0
    %385 = vdwg.mxu0
    %v386 = vadd.f32 %v329, %v381
    %v387 = vxor.u32 %v386, 2147483648
    %v388 = vmul.f32 %v387, 1.442695
    %v389 = vpow.pop %v388
    %v390 = vadd.f32 %v389, 1.0
    %v391 = vrcp.pop %v390
    %v392 = vmul.f32 1.0, %v391
    %393 = vrot.lane.b32.xlu0 %v187, 64
    %v394 = vpop.permute.xlu0 %393
    %v396 = vadd.f32 %v381, %v394
    %398 = vrot.lane.b32.xlu0 %v396, 64
    %v399 = vpop.permute.xlu0 %398
    %v401 = vmul.f32 %v392, %v399
    %403 = vrot.lane.b32.xlu0 %v401, 64
    %v404 = vpop.permute.xlu0 %403
    %v406 = vadd.f32 %v329, %v404
    %v407 = vtanh.pop %v406
    %v408 = vsub.f32 1.0, %v392
    %410 = vrot.lane.b32.xlu0 %v407, 96
    %v411 = vpop.permute.xlu0 %410
    %v413 = vmul.f32 %v408, %v411
    %v414 = vmul.f32 %v392, 0.0
    %v415 = vadd.f32 %v413, %v414
    %417 = vrot.lane.b32.xlu0 %v415, 96
    %v418 = vpop.permute.xlu0 %417
    %420 = vst.msk [vmem:[#allocation3] sm:$0xff] %vm201, %v418
    %s421 = scalar_lea.vmem [#allocation2], 8
    %v422 = vld [vmem:[%s421] sm:$0xff]
    %423 = vmatprep.subr.bf16.mxu0 0
    %424 = vmatpush1.bf16.msra.mxu0 0
    %425 = vmatprep.subr.bf16.mxu0 0
    %426 = vmatpush1.bf16.msra.mxu0 0
    %427 = vmatprep.subr.bf16.mxu0 0
    %428 = vmatpush1.bf16.msra.mxu0 0
    %429 = vmatprep.subr.bf16.mxu0 0
    %430 = vmatpush1.bf16.msra.mxu0 0
    %431 = vmatprep.subr.bf16.mxu0 0
    %432 = vmatpush1.bf16.msra.mxu0 0
    %433 = vmatprep.subr.bf16.mxu0 0
    %434 = vmatpush1.bf16.msra.mxu0 0
    %435 = vmatprep.subr.bf16.mxu0 0
    %436 = vmatpush1.bf16.msra.mxu0 %v198
    %437 = vmatprep.subr.bf16.mxu0 0
    %438 = vmatpush1.bf16.msra.mxu0 %v197
    %439 = vmatprep.subr.bf16.mxu0 0
    %440 = vmatpush2.bf16.msra.mxu0 0
    %441 = vmatprep.subr.bf16.mxu0 0
    %442 = vmatpush2.bf16.msra.mxu0 0
    %443 = vmatprep.subr.bf16.mxu0 0
    %444 = vmatpush2.bf16.msra.mxu0 0
    %445 = vmatprep.subr.bf16.mxu0 0
    %446 = vmatpush2.bf16.msra.mxu0 0
    %447 = vmatprep.subr.bf16.mxu0 0
    %448 = vmatpush2.bf16.msra.mxu0 0
    %449 = vmatprep.subr.bf16.mxu0 0
    %450 = vmatpush2.bf16.msra.mxu0 0
    %451 = vmatprep.subr.bf16.mxu0 0
    %452 = vmatpush2.bf16.msra.mxu0 0
    %453 = vmatprep.subr.bf16.mxu0 0
    %454 = vmatpush2.bf16.msra.mxu0 0
    %455 = vmatprep.mubr.bf16.mxu0 0
    %456 = vmatmul.mubr.bf16.gmra.mxu0 %v292
    %v457 = vpop.f32.mrf.mxu0
    %v458 = vadd.f32 0.0, %v457
    %v459 = vpop.f32.mrf.mxu0
    %v460 = vpop.f32.mrf.mxu0
    %v461 = vpop.f32.mrf.mxu0
    %462 = vdwg.mxu0
    %v463 = vadd.f32 %v422, %v458
    %v464 = vxor.u32 %v463, 2147483648
    %v465 = vmul.f32 %v464, 1.442695
    %v466 = vpow.pop %v465
    %v467 = vadd.f32 %v466, 1.0
    %v468 = vrcp.pop %v467
    %v469 = vmul.f32 1.0, %v468
    %v470 = vadd.f32 %v458, %v253
    %472 = vrot.lane.b32.xlu0 %v470, 64
    %v473 = vpop.permute.xlu0 %472
    %v475 = vmul.f32 %v469, %v473
    %477 = vrot.lane.b32.xlu0 %v475, 64
    %v478 = vpop.permute.xlu0 %477
    %v480 = vadd.f32 %v422, %v478
    %v481 = vtanh.pop %v480
    %v482 = vsub.f32 1.0, %v469
    %484 = vrot.lane.b32.xlu0 %v481, 96
    %v485 = vpop.permute.xlu0 %484
    %v487 = vmul.f32 %v482, %v485
    %v488 = vmul.f32 %v469, %v274
    %v489 = vadd.f32 %v487, %v488
    %v490 = vpack.c.bf16 %v489, %v489
    %492 = vrot.lane.b32.xlu0 %v490, 96
    %v493 = vpop.permute.xlu0 %492
    %v495 = vsel %vm201, %v493, 0
    %497 = vmatprep.subr.bf16.mxu0 0
    %498 = vmatpush1.bf16.msra.mxu0 0
    %499 = vmatprep.subr.bf16.mxu0 0
    %500 = vmatpush1.bf16.msra.mxu0 0
    %501 = vmatprep.subr.bf16.mxu0 0
    %502 = vmatpush1.bf16.msra.mxu0 0
    %503 = vmatprep.subr.bf16.mxu0 0
    %504 = vmatpush1.bf16.msra.mxu0 0
    %505 = vmatprep.subr.bf16.mxu0 0
    %506 = vmatpush1.bf16.msra.mxu0 0
    %507 = vmatprep.subr.bf16.mxu0 0
    %508 = vmatpush1.bf16.msra.mxu0 0
    %509 = vmatprep.subr.bf16.mxu0 0
    %510 = vmatpush1.bf16.msra.mxu0 %v288
    %511 = vmatprep.subr.bf16.mxu0 0
    %512 = vmatpush1.bf16.msra.mxu0 %v287
    %513 = vmatprep.subr.bf16.mxu0 0
    %514 = vmatpush2.bf16.msra.mxu0 0
    %515 = vmatprep.subr.bf16.mxu0 0
    %516 = vmatpush2.bf16.msra.mxu0 0
    %517 = vmatprep.subr.bf16.mxu0 0
    %518 = vmatpush2.bf16.msra.mxu0 0
    %519 = vmatprep.subr.bf16.mxu0 0
    %520 = vmatpush2.bf16.msra.mxu0 0
    %521 = vmatprep.subr.bf16.mxu0 0
    %522 = vmatpush2.bf16.msra.mxu0 0
    %523 = vmatprep.subr.bf16.mxu0 0
    %524 = vmatpush2.bf16.msra.mxu0 0
    %525 = vmatprep.subr.bf16.mxu0 0
    %526 = vmatpush2.bf16.msra.mxu0 0
    %527 = vmatprep.subr.bf16.mxu0 0
    %528 = vmatpush2.bf16.msra.mxu0 0
    %529 = vmatprep.mubr.bf16.mxu0 0
    %530 = vmatmul.mubr.bf16.gmra.mxu0 %v495
    %v531 = vpop.f32.mrf.mxu0
    %v532 = vadd.f32 %v174, %v531
    %v533 = vpop.f32.mrf.mxu0
    %v534 = vpop.f32.mrf.mxu0
    %v535 = vpop.f32.mrf.mxu0
    %536 = vdwg.mxu0
    %v537 = vpack.c.bf16 %v415, %v415
    %539 = vrot.lane.b32.xlu0 %v537, 96
    %v540 = vpop.permute.xlu0 %539
    %v542 = vsel %vm201, %v540, 0
    %544 = vmatprep.subr.bf16.mxu0 0
    %545 = vmatpush1.bf16.msra.mxu0 0
    %546 = vmatprep.subr.bf16.mxu0 0
    %547 = vmatpush1.bf16.msra.mxu0 0
    %548 = vmatprep.subr.bf16.mxu0 0
    %549 = vmatpush1.bf16.msra.mxu0 0
    %550 = vmatprep.subr.bf16.mxu0 0
    %551 = vmatpush1.bf16.msra.mxu0 0
    %552 = vmatprep.subr.bf16.mxu0 0
    %553 = vmatpush1.bf16.msra.mxu0 0
    %554 = vmatprep.subr.bf16.mxu0 0
    %555 = vmatpush1.bf16.msra.mxu0 0
    %556 = vmatprep.subr.bf16.mxu0 0
    %557 = vmatpush1.bf16.msra.mxu0 %v343
    %558 = vmatprep.subr.bf16.mxu0 0
    %559 = vmatpush1.bf16.msra.mxu0 %v342
    %560 = vmatprep.subr.bf16.mxu0 0
    %561 = vmatpush2.bf16.msra.mxu0 0
    %562 = vmatprep.subr.bf16.mxu0 0
    %563 = vmatpush2.bf16.msra.mxu0 0
    %564 = vmatprep.subr.bf16.mxu0 0
    %565 = vmatpush2.bf16.msra.mxu0 0
    %566 = vmatprep.subr.bf16.mxu0 0
    %567 = vmatpush2.bf16.msra.mxu0 0
    %568 = vmatprep.subr.bf16.mxu0 0
    %569 = vmatpush2.bf16.msra.mxu0 0
    %570 = vmatprep.subr.bf16.mxu0 0
    %571 = vmatpush2.bf16.msra.mxu0 0
    %572 = vmatprep.subr.bf16.mxu0 0
    %573 = vmatpush2.bf16.msra.mxu0 0
    %574 = vmatprep.subr.bf16.mxu0 0
    %575 = vmatpush2.bf16.msra.mxu0 0
    %576 = vmatprep.mubr.bf16.mxu0 0
    %577 = vmatmul.mubr.bf16.gmra.mxu0 %v542
    %v578 = vpop.f32.mrf.mxu0
    %v579 = vadd.f32 0.0, %v578
    %v580 = vpop.f32.mrf.mxu0
    %v581 = vpop.f32.mrf.mxu0
    %v582 = vpop.f32.mrf.mxu0
    %583 = vdwg.mxu0
    %v584 = vadd.f32 %v532, %v579
    %v585 = vxor.u32 %v584, 2147483648
    %v586 = vmul.f32 %v585, 1.442695
    %v587 = vpow.pop %v586
    %v588 = vadd.f32 %v587, 1.0
    %v589 = vrcp.pop %v588
    %v590 = vmul.f32 1.0, %v589
    %v591 = vadd.f32 %v579, %v394
    %593 = vrot.lane.b32.xlu0 %v591, 64
    %v594 = vpop.permute.xlu0 %593
    %v596 = vmul.f32 %v590, %v594
    %598 = vrot.lane.b32.xlu0 %v596, 64
    %v599 = vpop.permute.xlu0 %598
    %v601 = vadd.f32 %v532, %v599
    %v602 = vtanh.pop %v601
    %v603 = vsub.f32 1.0, %v590
    %605 = vrot.lane.b32.xlu0 %v602, 96
    %v606 = vpop.permute.xlu0 %605
    %v608 = vmul.f32 %v603, %v606
    %v609 = vmul.f32 %v590, %v415
    %v610 = vadd.f32 %v608, %v609
    %612 = vrot.lane.b32.xlu0 %v610, 96
    %v613 = vpop.permute.xlu0 %612
    %s615 = scalar_lea.vmem [#allocation3], 8
    %616 = vst.msk [vmem:[%s615] sm:$0xff] %vm201, %v613
    %s617 = scalar_lea.vmem [#allocation2], 16
    %v618 = vld [vmem:[%s617] sm:$0xff]
    %619 = vmatprep.subr.bf16.mxu0 0
    %620 = vmatpush1.bf16.msra.mxu0 0
    %621 = vmatprep.subr.bf16.mxu0 0
    %622 = vmatpush1.bf16.msra.mxu0 0
    %623 = vmatprep.subr.bf16.mxu0 0
    %624 = vmatpush1.bf16.msra.mxu0 0
    %625 = vmatprep.subr.bf16.mxu0 0
    %626 = vmatpush1.bf16.msra.mxu0 0
    %627 = vmatprep.subr.bf16.mxu0 0
    %628 = vmatpush1.bf16.msra.mxu0 0
    %629 = vmatprep.subr.bf16.mxu0 0
    %630 = vmatpush1.bf16.msra.mxu0 0
    %631 = vmatprep.subr.bf16.mxu0 0
    %632 = vmatpush1.bf16.msra.mxu0 %v198
    %633 = vmatprep.subr.bf16.mxu0 0
    %634 = vmatpush1.bf16.msra.mxu0 %v197
    %635 = vmatprep.subr.bf16.mxu0 0
    %636 = vmatpush2.bf16.msra.mxu0 0
    %637 = vmatprep.subr.bf16.mxu0 0
    %638 = vmatpush2.bf16.msra.mxu0 0
    %639 = vmatprep.subr.bf16.mxu0 0
    %640 = vmatpush2.bf16.msra.mxu0 0
    %641 = vmatprep.subr.bf16.mxu0 0
    %642 = vmatpush2.bf16.msra.mxu0 0
    %643 = vmatprep.subr.bf16.mxu0 0
    %644 = vmatpush2.bf16.msra.mxu0 0
    %645 = vmatprep.subr.bf16.mxu0 0
    %646 = vmatpush2.bf16.msra.mxu0 0
    %647 = vmatprep.subr.bf16.mxu0 0
    %648 = vmatpush2.bf16.msra.mxu0 0
    %649 = vmatprep.subr.bf16.mxu0 0
    %650 = vmatpush2.bf16.msra.mxu0 0
    %651 = vmatprep.mubr.bf16.mxu0 0
    %652 = vmatmul.mubr.bf16.gmra.mxu0 %v495
    %v653 = vpop.f32.mrf.mxu0
    %v654 = vadd.f32 0.0, %v653
    %v655 = vpop.f32.mrf.mxu0
    %v656 = vpop.f32.mrf.mxu0
    %v657 = vpop.f32.mrf.mxu0
    %658 = vdwg.mxu0
    %v659 = vadd.f32 %v618, %v654
    %v660 = vxor.u32 %v659, 2147483648
    %v661 = vmul.f32 %v660, 1.442695
    %v662 = vpow.pop %v661
    %v663 = vadd.f32 %v662, 1.0
    %v664 = vrcp.pop %v663
    %v665 = vmul.f32 1.0, %v664
    %v666 = vadd.f32 %v654, %v253
    %668 = vrot.lane.b32.xlu0 %v666, 64
    %v669 = vpop.permute.xlu0 %668
    %v671 = vmul.f32 %v665, %v669
    %673 = vrot.lane.b32.xlu0 %v671, 64
    %v674 = vpop.permute.xlu0 %673
    %v676 = vadd.f32 %v618, %v674
    %v677 = vtanh.pop %v676
    %v678 = vsub.f32 1.0, %v665
    %680 = vrot.lane.b32.xlu0 %v677, 96
    %v681 = vpop.permute.xlu0 %680
    %v683 = vmul.f32 %v678, %v681
    %v684 = vmul.f32 %v665, %v489
    %v685 = vadd.f32 %v683, %v684
    %v686 = vpack.c.bf16 %v685, %v685
    %688 = vrot.lane.b32.xlu0 %v686, 96
    %v689 = vpop.permute.xlu0 %688
    %v691 = vsel %vm201, %v689, 0
    %693 = vmatprep.subr.bf16.mxu0 0
    %694 = vmatpush1.bf16.msra.mxu0 0
    %695 = vmatprep.subr.bf16.mxu0 0
    %696 = vmatpush1.bf16.msra.mxu0 0
    %697 = vmatprep.subr.bf16.mxu0 0
    %698 = vmatpush1.bf16.msra.mxu0 0
    %699 = vmatprep.subr.bf16.mxu0 0
    %700 = vmatpush1.bf16.msra.mxu0 0
    %701 = vmatprep.subr.bf16.mxu0 0
    %702 = vmatpush1.bf16.msra.mxu0 0
    %703 = vmatprep.subr.bf16.mxu0 0
    %704 = vmatpush1.bf16.msra.mxu0 0
    %705 = vmatprep.subr.bf16.mxu0 0
    %706 = vmatpush1.bf16.msra.mxu0 %v288
    %707 = vmatprep.subr.bf16.mxu0 0
    %708 = vmatpush1.bf16.msra.mxu0 %v287
    %709 = vmatprep.subr.bf16.mxu0 0
    %710 = vmatpush2.bf16.msra.mxu0 0
    %711 = vmatprep.subr.bf16.mxu0 0
    %712 = vmatpush2.bf16.msra.mxu0 0
    %713 = vmatprep.subr.bf16.mxu0 0
    %714 = vmatpush2.bf16.msra.mxu0 0
    %715 = vmatprep.subr.bf16.mxu0 0
    %716 = vmatpush2.bf16.msra.mxu0 0
    %717 = vmatprep.subr.bf16.mxu0 0
    %718 = vmatpush2.bf16.msra.mxu0 0
    %719 = vmatprep.subr.bf16.mxu0 0
    %720 = vmatpush2.bf16.msra.mxu0 0
    %721 = vmatprep.subr.bf16.mxu0 0
    %722 = vmatpush2.bf16.msra.mxu0 0
    %723 = vmatprep.subr.bf16.mxu0 0
    %724 = vmatpush2.bf16.msra.mxu0 0
    %725 = vmatprep.mubr.bf16.mxu0 0
    %726 = vmatmul.mubr.bf16.gmra.mxu0 %v691
    %v727 = vpop.f32.mrf.mxu0
    %v728 = vadd.f32 %v174, %v727
    %v729 = vpop.f32.mrf.mxu0
    %v730 = vpop.f32.mrf.mxu0
    %v731 = vpop.f32.mrf.mxu0
    %732 = vdwg.mxu0
    %v733 = vpack.c.bf16 %v610, %v610
    %735 = vrot.lane.b32.xlu0 %v733, 96
    %v736 = vpop.permute.xlu0 %735
    %v738 = vsel %vm201, %v736, 0
    %740 = vmatprep.subr.bf16.mxu0 0
    %741 = vmatpush1.bf16.msra.mxu0 0
    %742 = vmatprep.subr.bf16.mxu0 0
    %743 = vmatpush1.bf16.msra.mxu0 0
    %744 = vmatprep.subr.bf16.mxu0 0
    %745 = vmatpush1.bf16.msra.mxu0 0
    %746 = vmatprep.subr.bf16.mxu0 0
    %747 = vmatpush1.bf16.msra.mxu0 0
    %748 = vmatprep.subr.bf16.mxu0 0
    %749 = vmatpush1.bf16.msra.mxu0 0
    %750 = vmatprep.subr.bf16.mxu0 0
    %751 = vmatpush1.bf16.msra.mxu0 0
    %752 = vmatprep.subr.bf16.mxu0 0
    %753 = vmatpush1.bf16.msra.mxu0 %v343
    %754 = vmatprep.subr.bf16.mxu0 0
    %755 = vmatpush1.bf16.msra.mxu0 %v342
    %756 = vmatprep.subr.bf16.mxu0 0
    %757 = vmatpush2.bf16.msra.mxu0 0
    %758 = vmatprep.subr.bf16.mxu0 0
    %759 = vmatpush2.bf16.msra.mxu0 0
    %760 = vmatprep.subr.bf16.mxu0 0
    %761 = vmatpush2.bf16.msra.mxu0 0
    %762 = vmatprep.subr.bf16.mxu0 0
    %763 = vmatpush2.bf16.msra.mxu0 0
    %764 = vmatprep.subr.bf16.mxu0 0
    %765 = vmatpush2.bf16.msra.mxu0 0
    %766 = vmatprep.subr.bf16.mxu0 0
    %767 = vmatpush2.bf16.msra.mxu0 0
    %768 = vmatprep.subr.bf16.mxu0 0
    %769 = vmatpush2.bf16.msra.mxu0 0
    %770 = vmatprep.subr.bf16.mxu0 0
    %771 = vmatpush2.bf16.msra.mxu0 0
    %772 = vmatprep.mubr.bf16.mxu0 0
    %773 = vmatmul.mubr.bf16.gmra.mxu0 %v738
    %v774 = vpop.f32.mrf.mxu0
    %v775 = vadd.f32 0.0, %v774
    %v776 = vpop.f32.mrf.mxu0
    %v777 = vpop.f32.mrf.mxu0
    %v778 = vpop.f32.mrf.mxu0
    %779 = vdwg.mxu0
    %v780 = vadd.f32 %v728, %v775
    %v781 = vxor.u32 %v780, 2147483648
    %v782 = vmul.f32 %v781, 1.442695
    %v783 = vpow.pop %v782
    %v784 = vadd.f32 %v783, 1.0
    %v785 = vrcp.pop %v784
    %v786 = vmul.f32 1.0, %v785
    %v787 = vadd.f32 %v775, %v394
    %789 = vrot.lane.b32.xlu0 %v787, 64
    %v790 = vpop.permute.xlu0 %789
    %v792 = vmul.f32 %v786, %v790
    %794 = vrot.lane.b32.xlu0 %v792, 64
    %v795 = vpop.permute.xlu0 %794
    %v797 = vadd.f32 %v728, %v795
    %v798 = vtanh.pop %v797
    %v799 = vsub.f32 1.0, %v786
    %801 = vrot.lane.b32.xlu0 %v798, 96
    %v802 = vpop.permute.xlu0 %801
    %v804 = vmul.f32 %v799, %v802
    %v805 = vmul.f32 %v786, %v610
    %v806 = vadd.f32 %v804, %v805
    %808 = vrot.lane.b32.xlu0 %v806, 96
    %v809 = vpop.permute.xlu0 %808
    %s811 = scalar_lea.vmem [#allocation3], 16
    %812 = vst.msk [vmem:[%s811] sm:$0xff] %vm201, %v809
    %s813 = scalar_lea.vmem [#allocation2], 24
    %v814 = vld [vmem:[%s813] sm:$0xff]
    %815 = vmatprep.subr.bf16.mxu0 0
    %816 = vmatpush1.bf16.msra.mxu0 0
    %817 = vmatprep.subr.bf16.mxu0 0
    %818 = vmatpush1.bf16.msra.mxu0 0
    %819 = vmatprep.subr.bf16.mxu0 0
    %820 = vmatpush1.bf16.msra.mxu0 0
    %821 = vmatprep.subr.bf16.mxu0 0
    %822 = vmatpush1.bf16.msra.mxu0 0
    %823 = vmatprep.subr.bf16.mxu0 0
    %824 = vmatpush1.bf16.msra.mxu0 0
    %825 = vmatprep.subr.bf16.mxu0 0
    %826 = vmatpush1.bf16.msra.mxu0 0
    %827 = vmatprep.subr.bf16.mxu0 0
    %828 = vmatpush1.bf16.msra.mxu0 %v198
    %829 = vmatprep.subr.bf16.mxu0 0
    %830 = vmatpush1.bf16.msra.mxu0 %v197
    %831 = vmatprep.subr.bf16.mxu0 0
    %832 = vmatpush2.bf16.msra.mxu0 0
    %833 = vmatprep.subr.bf16.mxu0 0
    %834 = vmatpush2.bf16.msra.mxu0 0
    %835 = vmatprep.subr.bf16.mxu0 0
    %836 = vmatpush2.bf16.msra.mxu0 0
    %837 = vmatprep.subr.bf16.mxu0 0
    %838 = vmatpush2.bf16.msra.mxu0 0
    %839 = vmatprep.subr.bf16.mxu0 0
    %840 = vmatpush2.bf16.msra.mxu0 0
    %841 = vmatprep.subr.bf16.mxu0 0
    %842 = vmatpush2.bf16.msra.mxu0 0
    %843 = vmatprep.subr.bf16.mxu0 0
    %844 = vmatpush2.bf16.msra.mxu0 0
    %845 = vmatprep.subr.bf16.mxu0 0
    %846 = vmatpush2.bf16.msra.mxu0 0
    %847 = vmatprep.mubr.bf16.mxu0 0
    %848 = vmatmul.mubr.bf16.gmra.mxu0 %v691
    %v849 = vpop.f32.mrf.mxu0
    %v850 = vadd.f32 0.0, %v849
    %v851 = vpop.f32.mrf.mxu0
    %v852 = vpop.f32.mrf.mxu0
    %v853 = vpop.f32.mrf.mxu0
    %854 = vdwg.mxu0
    %v855 = vadd.f32 %v814, %v850
    %v856 = vxor.u32 %v855, 2147483648
    %v857 = vmul.f32 %v856, 1.442695
    %v858 = vpow.pop %v857
    %v859 = vadd.f32 %v858, 1.0
    %v860 = vrcp.pop %v859
    %v861 = vmul.f32 1.0, %v860
    %v862 = vadd.f32 %v850, %v253
    %864 = vrot.lane.b32.xlu0 %v862, 64
    %v865 = vpop.permute.xlu0 %864
    %v867 = vmul.f32 %v861, %v865
    %869 = vrot.lane.b32.xlu0 %v867, 64
    %v870 = vpop.permute.xlu0 %869
    %v872 = vadd.f32 %v814, %v870
    %v873 = vtanh.pop %v872
    %v874 = vsub.f32 1.0, %v861
    %876 = vrot.lane.b32.xlu0 %v873, 96
    %v877 = vpop.permute.xlu0 %876
    %v879 = vmul.f32 %v874, %v877
    %v880 = vmul.f32 %v861, %v685
    %v881 = vadd.f32 %v879, %v880
    %v882 = vpack.c.bf16 %v881, %v881
    %884 = vrot.lane.b32.xlu0 %v882, 96
    %v885 = vpop.permute.xlu0 %884
    %v887 = vsel %vm201, %v885, 0
    %889 = vmatprep.subr.bf16.mxu0 0
    %890 = vmatpush1.bf16.msra.mxu0 0
    %891 = vmatprep.subr.bf16.mxu0 0
    %892 = vmatpush1.bf16.msra.mxu0 0
    %893 = vmatprep.subr.bf16.mxu0 0
    %894 = vmatpush1.bf16.msra.mxu0 0
    %895 = vmatprep.subr.bf16.mxu0 0
    %896 = vmatpush1.bf16.msra.mxu0 0
    %897 = vmatprep.subr.bf16.mxu0 0
    %898 = vmatpush1.bf16.msra.mxu0 0
    %899 = vmatprep.subr.bf16.mxu0 0
    %900 = vmatpush1.bf16.msra.mxu0 0
    %901 = vmatprep.subr.bf16.mxu0 0
    %902 = vmatpush1.bf16.msra.mxu0 %v288
    %903 = vmatprep.subr.bf16.mxu0 0
    %904 = vmatpush1.bf16.msra.mxu0 %v287
    %905 = vmatprep.subr.bf16.mxu0 0
    %906 = vmatpush2.bf16.msra.mxu0 0
    %907 = vmatprep.subr.bf16.mxu0 0
    %908 = vmatpush2.bf16.msra.mxu0 0
    %909 = vmatprep.subr.bf16.mxu0 0
    %910 = vmatpush2.bf16.msra.mxu0 0
    %911 = vmatprep.subr.bf16.mxu0 0
    %912 = vmatpush2.bf16.msra.mxu0 0
    %913 = vmatprep.subr.bf16.mxu0 0
    %914 = vmatpush2.bf16.msra.mxu0 0
    %915 = vmatprep.subr.bf16.mxu0 0
    %916 = vmatpush2.bf16.msra.mxu0 0
    %917 = vmatprep.subr.bf16.mxu0 0
    %918 = vmatpush2.bf16.msra.mxu0 0
    %919 = vmatprep.subr.bf16.mxu0 0
    %920 = vmatpush2.bf16.msra.mxu0 0
    %921 = vmatprep.mubr.bf16.mxu0 0
    %922 = vmatmul.mubr.bf16.gmra.mxu0 %v887
    %v923 = vpop.f32.mrf.mxu0
    %v924 = vadd.f32 %v174, %v923
    %v925 = vpop.f32.mrf.mxu0
    %v926 = vpop.f32.mrf.mxu0
    %v927 = vpop.f32.mrf.mxu0
    %928 = vdwg.mxu0
    %v929 = vpack.c.bf16 %v806, %v806
    %931 = vrot.lane.b32.xlu0 %v929, 96
    %v932 = vpop.permute.xlu0 %931
    %v934 = vsel %vm201, %v932, 0
    %936 = vmatprep.subr.bf16.mxu0 0
    %937 = vmatpush1.bf16.msra.mxu0 0
    %938 = vmatprep.subr.bf16.mxu0 0
    %939 = vmatpush1.bf16.msra.mxu0 0
    %940 = vmatprep.subr.bf16.mxu0 0
    %941 = vmatpush1.bf16.msra.mxu0 0
    %942 = vmatprep.subr.bf16.mxu0 0
    %943 = vmatpush1.bf16.msra.mxu0 0
    %944 = vmatprep.subr.bf16.mxu0 0
    %945 = vmatpush1.bf16.msra.mxu0 0
    %946 = vmatprep.subr.bf16.mxu0 0
    %947 = vmatpush1.bf16.msra.mxu0 0
    %948 = vmatprep.subr.bf16.mxu0 0
    %949 = vmatpush1.bf16.msra.mxu0 %v343
    %950 = vmatprep.subr.bf16.mxu0 0
    %951 = vmatpush1.bf16.msra.mxu0 %v342
    %952 = vmatprep.subr.bf16.mxu0 0
    %953 = vmatpush2.bf16.msra.mxu0 0
    %954 = vmatprep.subr.bf16.mxu0 0
    %955 = vmatpush2.bf16.msra.mxu0 0
    %956 = vmatprep.subr.bf16.mxu0 0
    %957 = vmatpush2.bf16.msra.mxu0 0
    %958 = vmatprep.subr.bf16.mxu0 0
    %959 = vmatpush2.bf16.msra.mxu0 0
    %960 = vmatprep.subr.bf16.mxu0 0
    %961 = vmatpush2.bf16.msra.mxu0 0
    %962 = vmatprep.subr.bf16.mxu0 0
    %963 = vmatpush2.bf16.msra.mxu0 0
    %964 = vmatprep.subr.bf16.mxu0 0
    %965 = vmatpush2.bf16.msra.mxu0 0
    %966 = vmatprep.subr.bf16.mxu0 0
    %967 = vmatpush2.bf16.msra.mxu0 0
    %968 = vmatprep.mubr.bf16.mxu0 0
    %969 = vmatmul.mubr.bf16.gmra.mxu0 %v934
    %v970 = vpop.f32.mrf.mxu0
    %v971 = vadd.f32 0.0, %v970
    %v972 = vpop.f32.mrf.mxu0
    %v973 = vpop.f32.mrf.mxu0
    %v974 = vpop.f32.mrf.mxu0
    %975 = vdwg.mxu0
    %v976 = vadd.f32 %v924, %v971
    %v977 = vxor.u32 %v976, 2147483648
    %v978 = vmul.f32 %v977, 1.442695
    %v979 = vpow.pop %v978
    %v980 = vadd.f32 %v979, 1.0
    %v981 = vrcp.pop %v980
    %v982 = vmul.f32 1.0, %v981
    %v983 = vadd.f32 %v971, %v394
    %985 = vrot.lane.b32.xlu0 %v983, 64
    %v986 = vpop.permute.xlu0 %985
    %v988 = vmul.f32 %v982, %v986
    %990 = vrot.lane.b32.xlu0 %v988, 64
    %v991 = vpop.permute.xlu0 %990
    %v993 = vadd.f32 %v924, %v991
    %v994 = vtanh.pop %v993
    %v995 = vsub.f32 1.0, %v982
    %997 = vrot.lane.b32.xlu0 %v994, 96
    %v998 = vpop.permute.xlu0 %997
    %v1000 = vmul.f32 %v995, %v998
    %v1001 = vmul.f32 %v982, %v806
    %v1002 = vadd.f32 %v1000, %v1001
    %1004 = vrot.lane.b32.xlu0 %v1002, 96
    %v1005 = vpop.permute.xlu0 %1004
    %s1007 = scalar_lea.vmem [#allocation3], 24
    %1008 = vst.msk [vmem:[%s1007] sm:$0xff] %vm201, %v1005
    %s1009 = scalar_lea.vmem [#allocation2], 32
    %v1010 = vld [vmem:[%s1009] sm:$0xff]
    %1011 = vmatprep.subr.bf16.mxu0 0
    %1012 = vmatpush1.bf16.msra.mxu0 0
    %1013 = vmatprep.subr.bf16.mxu0 0
    %1014 = vmatpush1.bf16.msra.mxu0 0
    %1015 = vmatprep.subr.bf16.mxu0 0
    %1016 = vmatpush1.bf16.msra.mxu0 0
    %1017 = vmatprep.subr.bf16.mxu0 0
    %1018 = vmatpush1.bf16.msra.mxu0 0
    %1019 = vmatprep.subr.bf16.mxu0 0
    %1020 = vmatpush1.bf16.msra.mxu0 0
    %1021 = vmatprep.subr.bf16.mxu0 0
    %1022 = vmatpush1.bf16.msra.mxu0 0
    %1023 = vmatprep.subr.bf16.mxu0 0
    %1024 = vmatpush1.bf16.msra.mxu0 %v198
    %1025 = vmatprep.subr.bf16.mxu0 0
    %1026 = vmatpush1.bf16.msra.mxu0 %v197
    %1027 = vmatprep.subr.bf16.mxu0 0
    %1028 = vmatpush2.bf16.msra.mxu0 0
    %1029 = vmatprep.subr.bf16.mxu0 0
    %1030 = vmatpush2.bf16.msra.mxu0 0
    %1031 = vmatprep.subr.bf16.mxu0 0
    %1032 = vmatpush2.bf16.msra.mxu0 0
    %1033 = vmatprep.subr.bf16.mxu0 0
    %1034 = vmatpush2.bf16.msra.mxu0 0
    %1035 = vmatprep.subr.bf16.mxu0 0
    %1036 = vmatpush2.bf16.msra.mxu0 0
    %1037 = vmatprep.subr.bf16.mxu0 0
    %1038 = vmatpush2.bf16.msra.mxu0 0
    %1039 = vmatprep.subr.bf16.mxu0 0
    %1040 = vmatpush2.bf16.msra.mxu0 0
    %1041 = vmatprep.subr.bf16.mxu0 0
    %1042 = vmatpush2.bf16.msra.mxu0 0
    %1043 = vmatprep.mubr.bf16.mxu0 0
    %1044 = vmatmul.mubr.bf16.gmra.mxu0 %v887
    %v1045 = vpop.f32.mrf.mxu0
    %v1046 = vadd.f32 0.0, %v1045
    %v1047 = vpop.f32.mrf.mxu0
    %v1048 = vpop.f32.mrf.mxu0
    %v1049 = vpop.f32.mrf.mxu0
    %1050 = vdwg.mxu0
    %v1051 = vadd.f32 %v1010, %v1046
    %v1052 = vxor.u32 %v1051, 2147483648
    %v1053 = vmul.f32 %v1052, 1.442695
    %v1054 = vpow.pop %v1053
    %v1055 = vadd.f32 %v1054, 1.0
    %v1056 = vrcp.pop %v1055
    %v1057 = vmul.f32 1.0, %v1056
    %v1058 = vadd.f32 %v1046, %v253
    %1060 = vrot.lane.b32.xlu0 %v1058, 64
    %v1061 = vpop.permute.xlu0 %1060
    %v1063 = vmul.f32 %v1057, %v1061
    %1065 = vrot.lane.b32.xlu0 %v1063, 64
    %v1066 = vpop.permute.xlu0 %1065
    %v1068 = vadd.f32 %v1010, %v1066
    %v1069 = vtanh.pop %v1068
    %v1070 = vsub.f32 1.0, %v1057
    %1072 = vrot.lane.b32.xlu0 %v1069, 96
    %v1073 = vpop.permute.xlu0 %1072
    %v1075 = vmul.f32 %v1070, %v1073
    %v1076 = vmul.f32 %v1057, %v881
    %v1077 = vadd.f32 %v1075, %v1076
    %v1078 = vpack.c.bf16 %v1077, %v1077
    %1080 = vrot.lane.b32.xlu0 %v1078, 96
    %v1081 = vpop.permute.xlu0 %1080
    %v1083 = vsel %vm201, %v1081, 0
    %1085 = vmatprep.subr.bf16.mxu0 0
    %1086 = vmatpush1.bf16.msra.mxu0 0
    %1087 = vmatprep.subr.bf16.mxu0 0
    %1088 = vmatpush1.bf16.msra.mxu0 0
    %1089 = vmatprep.subr.bf16.mxu0 0
    %1090 = vmatpush1.bf16.msra.mxu0 0
    %1091 = vmatprep.subr.bf16.mxu0 0
    %1092 = vmatpush1.bf16.msra.mxu0 0
    %1093 = vmatprep.subr.bf16.mxu0 0
    %1094 = vmatpush1.bf16.msra.mxu0 0
    %1095 = vmatprep.subr.bf16.mxu0 0
    %1096 = vmatpush1.bf16.msra.mxu0 0
    %1097 = vmatprep.subr.bf16.mxu0 0
    %1098 = vmatpush1.bf16.msra.mxu0 %v288
    %1099 = vmatprep.subr.bf16.mxu0 0
    %1100 = vmatpush1.bf16.msra.mxu0 %v287
    %1101 = vmatprep.subr.bf16.mxu0 0
    %1102 = vmatpush2.bf16.msra.mxu0 0
    %1103 = vmatprep.subr.bf16.mxu0 0
    %1104 = vmatpush2.bf16.msra.mxu0 0
    %1105 = vmatprep.subr.bf16.mxu0 0
    %1106 = vmatpush2.bf16.msra.mxu0 0
    %1107 = vmatprep.subr.bf16.mxu0 0
    %1108 = vmatpush2.bf16.msra.mxu0 0
    %1109 = vmatprep.subr.bf16.mxu0 0
    %1110 = vmatpush2.bf16.msra.mxu0 0
    %1111 = vmatprep.subr.bf16.mxu0 0
    %1112 = vmatpush2.bf16.msra.mxu0 0
    %1113 = vmatprep.subr.bf16.mxu0 0
    %1114 = vmatpush2.bf16.msra.mxu0 0
    %1115 = vmatprep.subr.bf16.mxu0 0
    %1116 = vmatpush2.bf16.msra.mxu0 0
    %1117 = vmatprep.mubr.bf16.mxu0 0
    %1118 = vmatmul.mubr.bf16.gmra.mxu0 %v1083
    %v1119 = vpop.f32.mrf.mxu0
    %v1120 = vadd.f32 %v174, %v1119
    %v1121 = vpop.f32.mrf.mxu0
    %v1122 = vpop.f32.mrf.mxu0
    %v1123 = vpop.f32.mrf.mxu0
    %1124 = vdwg.mxu0
    %v1125 = vpack.c.bf16 %v1002, %v1002
    %1127 = vrot.lane.b32.xlu0 %v1125, 96
    %v1128 = vpop.permute.xlu0 %1127
    %v1130 = vsel %vm201, %v1128, 0
    %1132 = vmatprep.subr.bf16.mxu0 0
    %1133 = vmatpush1.bf16.msra.mxu0 0
    %1134 = vmatprep.subr.bf16.mxu0 0
    %1135 = vmatpush1.bf16.msra.mxu0 0
    %1136 = vmatprep.subr.bf16.mxu0 0
    %1137 = vmatpush1.bf16.msra.mxu0 0
    %1138 = vmatprep.subr.bf16.mxu0 0
    %1139 = vmatpush1.bf16.msra.mxu0 0
    %1140 = vmatprep.subr.bf16.mxu0 0
    %1141 = vmatpush1.bf16.msra.mxu0 0
    %1142 = vmatprep.subr.bf16.mxu0 0
    %1143 = vmatpush1.bf16.msra.mxu0 0
    %1144 = vmatprep.subr.bf16.mxu0 0
    %1145 = vmatpush1.bf16.msra.mxu0 %v343
    %1146 = vmatprep.subr.bf16.mxu0 0
    %1147 = vmatpush1.bf16.msra.mxu0 %v342
    %1148 = vmatprep.subr.bf16.mxu0 0
    %1149 = vmatpush2.bf16.msra.mxu0 0
    %1150 = vmatprep.subr.bf16.mxu0 0
    %1151 = vmatpush2.bf16.msra.mxu0 0
    %1152 = vmatprep.subr.bf16.mxu0 0
    %1153 = vmatpush2.bf16.msra.mxu0 0
    %1154 = vmatprep.subr.bf16.mxu0 0
    %1155 = vmatpush2.bf16.msra.mxu0 0
    %1156 = vmatprep.subr.bf16.mxu0 0
    %1157 = vmatpush2.bf16.msra.mxu0 0
    %1158 = vmatprep.subr.bf16.mxu0 0
    %1159 = vmatpush2.bf16.msra.mxu0 0
    %1160 = vmatprep.subr.bf16.mxu0 0
    %1161 = vmatpush2.bf16.msra.mxu0 0
    %1162 = vmatprep.subr.bf16.mxu0 0
    %1163 = vmatpush2.bf16.msra.mxu0 0
    %1164 = vmatprep.mubr.bf16.mxu0 0
    %1165 = vmatmul.mubr.bf16.gmra.mxu0 %v1130
    %v1166 = vpop.f32.mrf.mxu0
    %v1167 = vadd.f32 0.0, %v1166
    %v1168 = vpop.f32.mrf.mxu0
    %v1169 = vpop.f32.mrf.mxu0
    %v1170 = vpop.f32.mrf.mxu0
    %1171 = vdwg.mxu0
    %v1172 = vadd.f32 %v1120, %v1167
    %v1173 = vxor.u32 %v1172, 2147483648
    %v1174 = vmul.f32 %v1173, 1.442695
    %v1175 = vpow.pop %v1174
    %v1176 = vadd.f32 %v1175, 1.0
    %v1177 = vrcp.pop %v1176
    %v1178 = vmul.f32 1.0, %v1177
    %v1179 = vadd.f32 %v1167, %v394
    %1181 = vrot.lane.b32.xlu0 %v1179, 64
    %v1182 = vpop.permute.xlu0 %1181
    %v1184 = vmul.f32 %v1178, %v1182
    %1186 = vrot.lane.b32.xlu0 %v1184, 64
    %v1187 = vpop.permute.xlu0 %1186
    %v1189 = vadd.f32 %v1120, %v1187
    %v1190 = vtanh.pop %v1189
    %v1191 = vsub.f32 1.0, %v1178
    %1193 = vrot.lane.b32.xlu0 %v1190, 96
    %v1194 = vpop.permute.xlu0 %1193
    %v1196 = vmul.f32 %v1191, %v1194
    %v1197 = vmul.f32 %v1178, %v1002
    %v1198 = vadd.f32 %v1196, %v1197
    %1200 = vrot.lane.b32.xlu0 %v1198, 96
    %v1201 = vpop.permute.xlu0 %1200
    %s1203 = scalar_lea.vmem [#allocation3], 32
    %1204 = vst.msk [vmem:[%s1203] sm:$0xff] %vm201, %v1201
    %s1205 = scalar_lea.vmem [#allocation2], 40
    %v1206 = vld [vmem:[%s1205] sm:$0xff]
    %1207 = vmatprep.subr.bf16.mxu0 0
    %1208 = vmatpush1.bf16.msra.mxu0 0
    %1209 = vmatprep.subr.bf16.mxu0 0
    %1210 = vmatpush1.bf16.msra.mxu0 0
    %1211 = vmatprep.subr.bf16.mxu0 0
    %1212 = vmatpush1.bf16.msra.mxu0 0
    %1213 = vmatprep.subr.bf16.mxu0 0
    %1214 = vmatpush1.bf16.msra.mxu0 0
    %1215 = vmatprep.subr.bf16.mxu0 0
    %1216 = vmatpush1.bf16.msra.mxu0 0
    %1217 = vmatprep.subr.bf16.mxu0 0
    %1218 = vmatpush1.bf16.msra.mxu0 0
    %1219 = vmatprep.subr.bf16.mxu0 0
    %1220 = vmatpush1.bf16.msra.mxu0 %v198
    %1221 = vmatprep.subr.bf16.mxu0 0
    %1222 = vmatpush1.bf16.msra.mxu0 %v197
    %1223 = vmatprep.subr.bf16.mxu0 0
    %1224 = vmatpush2.bf16.msra.mxu0 0
    %1225 = vmatprep.subr.bf16.mxu0 0
    %1226 = vmatpush2.bf16.msra.mxu0 0
    %1227 = vmatprep.subr.bf16.mxu0 0
    %1228 = vmatpush2.bf16.msra.mxu0 0
    %1229 = vmatprep.subr.bf16.mxu0 0
    %1230 = vmatpush2.bf16.msra.mxu0 0
    %1231 = vmatprep.subr.bf16.mxu0 0
    %1232 = vmatpush2.bf16.msra.mxu0 0
    %1233 = vmatprep.subr.bf16.mxu0 0
    %1234 = vmatpush2.bf16.msra.mxu0 0
    %1235 = vmatprep.subr.bf16.mxu0 0
    %1236 = vmatpush2.bf16.msra.mxu0 0
    %1237 = vmatprep.subr.bf16.mxu0 0
    %1238 = vmatpush2.bf16.msra.mxu0 0
    %1239 = vmatprep.mubr.bf16.mxu0 0
    %1240 = vmatmul.mubr.bf16.gmra.mxu0 %v1083
    %v1241 = vpop.f32.mrf.mxu0
    %v1242 = vadd.f32 0.0, %v1241
    %v1243 = vpop.f32.mrf.mxu0
    %v1244 = vpop.f32.mrf.mxu0
    %v1245 = vpop.f32.mrf.mxu0
    %1246 = vdwg.mxu0
    %v1247 = vadd.f32 %v1206, %v1242
    %v1248 = vxor.u32 %v1247, 2147483648
    %v1249 = vmul.f32 %v1248, 1.442695
    %v1250 = vpow.pop %v1249
    %v1251 = vadd.f32 %v1250, 1.0
    %v1252 = vrcp.pop %v1251
    %v1253 = vmul.f32 1.0, %v1252
    %v1254 = vadd.f32 %v1242, %v253
    %1256 = vrot.lane.b32.xlu0 %v1254, 64
    %v1257 = vpop.permute.xlu0 %1256
    %v1259 = vmul.f32 %v1253, %v1257
    %1261 = vrot.lane.b32.xlu0 %v1259, 64
    %v1262 = vpop.permute.xlu0 %1261
    %v1264 = vadd.f32 %v1206, %v1262
    %v1265 = vtanh.pop %v1264
    %v1266 = vsub.f32 1.0, %v1253
    %1268 = vrot.lane.b32.xlu0 %v1265, 96
    %v1269 = vpop.permute.xlu0 %1268
    %v1271 = vmul.f32 %v1266, %v1269
    %v1272 = vmul.f32 %v1253, %v1077
    %v1273 = vadd.f32 %v1271, %v1272
    %v1274 = vpack.c.bf16 %v1273, %v1273
    %1276 = vrot.lane.b32.xlu0 %v1274, 96
    %v1277 = vpop.permute.xlu0 %1276
    %v1279 = vsel %vm201, %v1277, 0
    %1281 = vmatprep.subr.bf16.mxu0 0
    %1282 = vmatpush1.bf16.msra.mxu0 0
    %1283 = vmatprep.subr.bf16.mxu0 0
    %1284 = vmatpush1.bf16.msra.mxu0 0
    %1285 = vmatprep.subr.bf16.mxu0 0
    %1286 = vmatpush1.bf16.msra.mxu0 0
    %1287 = vmatprep.subr.bf16.mxu0 0
    %1288 = vmatpush1.bf16.msra.mxu0 0
    %1289 = vmatprep.subr.bf16.mxu0 0
    %1290 = vmatpush1.bf16.msra.mxu0 0
    %1291 = vmatprep.subr.bf16.mxu0 0
    %1292 = vmatpush1.bf16.msra.mxu0 0
    %1293 = vmatprep.subr.bf16.mxu0 0
    %1294 = vmatpush1.bf16.msra.mxu0 %v288
    %1295 = vmatprep.subr.bf16.mxu0 0
    %1296 = vmatpush1.bf16.msra.mxu0 %v287
    %1297 = vmatprep.subr.bf16.mxu0 0
    %1298 = vmatpush2.bf16.msra.mxu0 0
    %1299 = vmatprep.subr.bf16.mxu0 0
    %1300 = vmatpush2.bf16.msra.mxu0 0
    %1301 = vmatprep.subr.bf16.mxu0 0
    %1302 = vmatpush2.bf16.msra.mxu0 0
    %1303 = vmatprep.subr.bf16.mxu0 0
    %1304 = vmatpush2.bf16.msra.mxu0 0
    %1305 = vmatprep.subr.bf16.mxu0 0
    %1306 = vmatpush2.bf16.msra.mxu0 0
    %1307 = vmatprep.subr.bf16.mxu0 0
    %1308 = vmatpush2.bf16.msra.mxu0 0
    %1309 = vmatprep.subr.bf16.mxu0 0
    %1310 = vmatpush2.bf16.msra.mxu0 0
    %1311 = vmatprep.subr.bf16.mxu0 0
    %1312 = vmatpush2.bf16.msra.mxu0 0
    %1313 = vmatprep.mubr.bf16.mxu0 0
    %1314 = vmatmul.mubr.bf16.gmra.mxu0 %v1279
    %v1315 = vpop.f32.mrf.mxu0
    %v1316 = vadd.f32 %v174, %v1315
    %v1317 = vpop.f32.mrf.mxu0
    %v1318 = vpop.f32.mrf.mxu0
    %v1319 = vpop.f32.mrf.mxu0
    %1320 = vdwg.mxu0
    %v1321 = vpack.c.bf16 %v1198, %v1198
    %1323 = vrot.lane.b32.xlu0 %v1321, 96
    %v1324 = vpop.permute.xlu0 %1323
    %v1326 = vsel %vm201, %v1324, 0
    %1328 = vmatprep.subr.bf16.mxu0 0
    %1329 = vmatpush1.bf16.msra.mxu0 0
    %1330 = vmatprep.subr.bf16.mxu0 0
    %1331 = vmatpush1.bf16.msra.mxu0 0
    %1332 = vmatprep.subr.bf16.mxu0 0
    %1333 = vmatpush1.bf16.msra.mxu0 0
    %1334 = vmatprep.subr.bf16.mxu0 0
    %1335 = vmatpush1.bf16.msra.mxu0 0
    %1336 = vmatprep.subr.bf16.mxu0 0
    %1337 = vmatpush1.bf16.msra.mxu0 0
    %1338 = vmatprep.subr.bf16.mxu0 0
    %1339 = vmatpush1.bf16.msra.mxu0 0
    %1340 = vmatprep.subr.bf16.mxu0 0
    %1341 = vmatpush1.bf16.msra.mxu0 %v343
    %1342 = vmatprep.subr.bf16.mxu0 0
    %1343 = vmatpush1.bf16.msra.mxu0 %v342
    %1344 = vmatprep.subr.bf16.mxu0 0
    %1345 = vmatpush2.bf16.msra.mxu0 0
    %1346 = vmatprep.subr.bf16.mxu0 0
    %1347 = vmatpush2.bf16.msra.mxu0 0
    %1348 = vmatprep.subr.bf16.mxu0 0
    %1349 = vmatpush2.bf16.msra.mxu0 0
    %1350 = vmatprep.subr.bf16.mxu0 0
    %1351 = vmatpush2.bf16.msra.mxu0 0
    %1352 = vmatprep.subr.bf16.mxu0 0
    %1353 = vmatpush2.bf16.msra.mxu0 0
    %1354 = vmatprep.subr.bf16.mxu0 0
    %1355 = vmatpush2.bf16.msra.mxu0 0
    %1356 = vmatprep.subr.bf16.mxu0 0
    %1357 = vmatpush2.bf16.msra.mxu0 0
    %1358 = vmatprep.subr.bf16.mxu0 0
    %1359 = vmatpush2.bf16.msra.mxu0 0
    %1360 = vmatprep.mubr.bf16.mxu0 0
    %1361 = vmatmul.mubr.bf16.gmra.mxu0 %v1326
    %v1362 = vpop.f32.mrf.mxu0
    %v1363 = vadd.f32 0.0, %v1362
    %v1364 = vpop.f32.mrf.mxu0
    %v1365 = vpop.f32.mrf.mxu0
    %v1366 = vpop.f32.mrf.mxu0
    %1367 = vdwg.mxu0
    %v1368 = vadd.f32 %v1316, %v1363
    %v1369 = vxor.u32 %v1368, 2147483648
    %v1370 = vmul.f32 %v1369, 1.442695
    %v1371 = vpow.pop %v1370
    %v1372 = vadd.f32 %v1371, 1.0
    %v1373 = vrcp.pop %v1372
    %v1374 = vmul.f32 1.0, %v1373
    %v1375 = vadd.f32 %v1363, %v394
    %1377 = vrot.lane.b32.xlu0 %v1375, 64
    %v1378 = vpop.permute.xlu0 %1377
    %v1380 = vmul.f32 %v1374, %v1378
    %1382 = vrot.lane.b32.xlu0 %v1380, 64
    %v1383 = vpop.permute.xlu0 %1382
    %v1385 = vadd.f32 %v1316, %v1383
    %v1386 = vtanh.pop %v1385
    %v1387 = vsub.f32 1.0, %v1374
    %1389 = vrot.lane.b32.xlu0 %v1386, 96
    %v1390 = vpop.permute.xlu0 %1389
    %v1392 = vmul.f32 %v1387, %v1390
    %v1393 = vmul.f32 %v1374, %v1198
    %v1394 = vadd.f32 %v1392, %v1393
    %1396 = vrot.lane.b32.xlu0 %v1394, 96
    %v1397 = vpop.permute.xlu0 %1396
    %s1399 = scalar_lea.vmem [#allocation3], 40
    %1400 = vst.msk [vmem:[%s1399] sm:$0xff] %vm201, %v1397
    %s1401 = scalar_lea.vmem [#allocation2], 48
    %v1402 = vld [vmem:[%s1401] sm:$0xff]
    %1403 = vmatprep.subr.bf16.mxu0 0
    %1404 = vmatpush1.bf16.msra.mxu0 0
    %1405 = vmatprep.subr.bf16.mxu0 0
    %1406 = vmatpush1.bf16.msra.mxu0 0
    %1407 = vmatprep.subr.bf16.mxu0 0
    %1408 = vmatpush1.bf16.msra.mxu0 0
    %1409 = vmatprep.subr.bf16.mxu0 0
    %1410 = vmatpush1.bf16.msra.mxu0 0
    %1411 = vmatprep.subr.bf16.mxu0 0
    %1412 = vmatpush1.bf16.msra.mxu0 0
    %1413 = vmatprep.subr.bf16.mxu0 0
    %1414 = vmatpush1.bf16.msra.mxu0 0
    %1415 = vmatprep.subr.bf16.mxu0 0
    %1416 = vmatpush1.bf16.msra.mxu0 %v198
    %1417 = vmatprep.subr.bf16.mxu0 0
    %1418 = vmatpush1.bf16.msra.mxu0 %v197
    %1419 = vmatprep.subr.bf16.mxu0 0
    %1420 = vmatpush2.bf16.msra.mxu0 0
    %1421 = vmatprep.subr.bf16.mxu0 0
    %1422 = vmatpush2.bf16.msra.mxu0 0
    %1423 = vmatprep.subr.bf16.mxu0 0
    %1424 = vmatpush2.bf16.msra.mxu0 0
    %1425 = vmatprep.subr.bf16.mxu0 0
    %1426 = vmatpush2.bf16.msra.mxu0 0
    %1427 = vmatprep.subr.bf16.mxu0 0
    %1428 = vmatpush2.bf16.msra.mxu0 0
    %1429 = vmatprep.subr.bf16.mxu0 0
    %1430 = vmatpush2.bf16.msra.mxu0 0
    %1431 = vmatprep.subr.bf16.mxu0 0
    %1432 = vmatpush2.bf16.msra.mxu0 0
    %1433 = vmatprep.subr.bf16.mxu0 0
    %1434 = vmatpush2.bf16.msra.mxu0 0
    %1435 = vmatprep.mubr.bf16.mxu0 0
    %1436 = vmatmul.mubr.bf16.gmra.mxu0 %v1279
    %v1437 = vpop.f32.mrf.mxu0
    %v1438 = vadd.f32 0.0, %v1437
    %v1439 = vpop.f32.mrf.mxu0
    %v1440 = vpop.f32.mrf.mxu0
    %v1441 = vpop.f32.mrf.mxu0
    %1442 = vdwg.mxu0
    %v1443 = vadd.f32 %v1402, %v1438
    %v1444 = vxor.u32 %v1443, 2147483648
    %v1445 = vmul.f32 %v1444, 1.442695
    %v1446 = vpow.pop %v1445
    %v1447 = vadd.f32 %v1446, 1.0
    %v1448 = vrcp.pop %v1447
    %v1449 = vmul.f32 1.0, %v1448
    %v1450 = vadd.f32 %v1438, %v253
    %1452 = vrot.lane.b32.xlu0 %v1450, 64
    %v1453 = vpop.permute.xlu0 %1452
    %v1455 = vmul.f32 %v1449, %v1453
    %1457 = vrot.lane.b32.xlu0 %v1455, 64
    %v1458 = vpop.permute.xlu0 %1457
    %v1460 = vadd.f32 %v1402, %v1458
    %v1461 = vtanh.pop %v1460
    %v1462 = vsub.f32 1.0, %v1449
    %1464 = vrot.lane.b32.xlu0 %v1461, 96
    %v1465 = vpop.permute.xlu0 %1464
    %v1467 = vmul.f32 %v1462, %v1465
    %v1468 = vmul.f32 %v1449, %v1273
    %v1469 = vadd.f32 %v1467, %v1468
    %v1470 = vpack.c.bf16 %v1469, %v1469
    %1472 = vrot.lane.b32.xlu0 %v1470, 96
    %v1473 = vpop.permute.xlu0 %1472
    %v1475 = vsel %vm201, %v1473, 0
    %1477 = vmatprep.subr.bf16.mxu0 0
    %1478 = vmatpush1.bf16.msra.mxu0 0
    %1479 = vmatprep.subr.bf16.mxu0 0
    %1480 = vmatpush1.bf16.msra.mxu0 0
    %1481 = vmatprep.subr.bf16.mxu0 0
    %1482 = vmatpush1.bf16.msra.mxu0 0
    %1483 = vmatprep.subr.bf16.mxu0 0
    %1484 = vmatpush1.bf16.msra.mxu0 0
    %1485 = vmatprep.subr.bf16.mxu0 0
    %1486 = vmatpush1.bf16.msra.mxu0 0
    %1487 = vmatprep.subr.bf16.mxu0 0
    %1488 = vmatpush1.bf16.msra.mxu0 0
    %1489 = vmatprep.subr.bf16.mxu0 0
    %1490 = vmatpush1.bf16.msra.mxu0 %v288
    %1491 = vmatprep.subr.bf16.mxu0 0
    %1492 = vmatpush1.bf16.msra.mxu0 %v287
    %1493 = vmatprep.subr.bf16.mxu0 0
    %1494 = vmatpush2.bf16.msra.mxu0 0
    %1495 = vmatprep.subr.bf16.mxu0 0
    %1496 = vmatpush2.bf16.msra.mxu0 0
    %1497 = vmatprep.subr.bf16.mxu0 0
    %1498 = vmatpush2.bf16.msra.mxu0 0
    %1499 = vmatprep.subr.bf16.mxu0 0
    %1500 = vmatpush2.bf16.msra.mxu0 0
    %1501 = vmatprep.subr.bf16.mxu0 0
    %1502 = vmatpush2.bf16.msra.mxu0 0
    %1503 = vmatprep.subr.bf16.mxu0 0
    %1504 = vmatpush2.bf16.msra.mxu0 0
    %1505 = vmatprep.subr.bf16.mxu0 0
    %1506 = vmatpush2.bf16.msra.mxu0 0
    %1507 = vmatprep.subr.bf16.mxu0 0
    %1508 = vmatpush2.bf16.msra.mxu0 0
    %1509 = vmatprep.mubr.bf16.mxu0 0
    %1510 = vmatmul.mubr.bf16.gmra.mxu0 %v1475
    %v1511 = vpop.f32.mrf.mxu0
    %v1512 = vadd.f32 %v174, %v1511
    %v1513 = vpop.f32.mrf.mxu0
    %v1514 = vpop.f32.mrf.mxu0
    %v1515 = vpop.f32.mrf.mxu0
    %1516 = vdwg.mxu0
    %v1517 = vpack.c.bf16 %v1394, %v1394
    %1519 = vrot.lane.b32.xlu0 %v1517, 96
    %v1520 = vpop.permute.xlu0 %1519
    %v1522 = vsel %vm201, %v1520, 0
    %1524 = vmatprep.subr.bf16.mxu0 0
    %1525 = vmatpush1.bf16.msra.mxu0 0
    %1526 = vmatprep.subr.bf16.mxu0 0
    %1527 = vmatpush1.bf16.msra.mxu0 0
    %1528 = vmatprep.subr.bf16.mxu0 0
    %1529 = vmatpush1.bf16.msra.mxu0 0
    %1530 = vmatprep.subr.bf16.mxu0 0
    %1531 = vmatpush1.bf16.msra.mxu0 0
    %1532 = vmatprep.subr.bf16.mxu0 0
    %1533 = vmatpush1.bf16.msra.mxu0 0
    %1534 = vmatprep.subr.bf16.mxu0 0
    %1535 = vmatpush1.bf16.msra.mxu0 0
    %1536 = vmatprep.subr.bf16.mxu0 0
    %1537 = vmatpush1.bf16.msra.mxu0 %v343
    %1538 = vmatprep.subr.bf16.mxu0 0
    %1539 = vmatpush1.bf16.msra.mxu0 %v342
    %1540 = vmatprep.subr.bf16.mxu0 0
    %1541 = vmatpush2.bf16.msra.mxu0 0
    %1542 = vmatprep.subr.bf16.mxu0 0
    %1543 = vmatpush2.bf16.msra.mxu0 0
    %1544 = vmatprep.subr.bf16.mxu0 0
    %1545 = vmatpush2.bf16.msra.mxu0 0
    %1546 = vmatprep.subr.bf16.mxu0 0
    %1547 = vmatpush2.bf16.msra.mxu0 0
    %1548 = vmatprep.subr.bf16.mxu0 0
    %1549 = vmatpush2.bf16.msra.mxu0 0
    %1550 = vmatprep.subr.bf16.mxu0 0
    %1551 = vmatpush2.bf16.msra.mxu0 0
    %1552 = vmatprep.subr.bf16.mxu0 0
    %1553 = vmatpush2.bf16.msra.mxu0 0
    %1554 = vmatprep.subr.bf16.mxu0 0
    %1555 = vmatpush2.bf16.msra.mxu0 0
    %1556 = vmatprep.mubr.bf16.mxu0 0
    %1557 = vmatmul.mubr.bf16.gmra.mxu0 %v1522
    %v1558 = vpop.f32.mrf.mxu0
    %v1559 = vadd.f32 0.0, %v1558
    %v1560 = vpop.f32.mrf.mxu0
    %v1561 = vpop.f32.mrf.mxu0
    %v1562 = vpop.f32.mrf.mxu0
    %1563 = vdwg.mxu0
    %v1564 = vadd.f32 %v1512, %v1559
    %v1565 = vxor.u32 %v1564, 2147483648
    %v1566 = vmul.f32 %v1565, 1.442695
    %v1567 = vpow.pop %v1566
    %v1568 = vadd.f32 %v1567, 1.0
    %v1569 = vrcp.pop %v1568
    %v1570 = vmul.f32 1.0, %v1569
    %v1571 = vadd.f32 %v1559, %v394
    %1573 = vrot.lane.b32.xlu0 %v1571, 64
    %v1574 = vpop.permute.xlu0 %1573
    %v1576 = vmul.f32 %v1570, %v1574
    %1578 = vrot.lane.b32.xlu0 %v1576, 64
    %v1579 = vpop.permute.xlu0 %1578
    %v1581 = vadd.f32 %v1512, %v1579
    %v1582 = vtanh.pop %v1581
    %v1583 = vsub.f32 1.0, %v1570
    %1585 = vrot.lane.b32.xlu0 %v1582, 96
    %v1586 = vpop.permute.xlu0 %1585
    %v1588 = vmul.f32 %v1583, %v1586
    %v1589 = vmul.f32 %v1570, %v1394
    %v1590 = vadd.f32 %v1588, %v1589
    %1592 = vrot.lane.b32.xlu0 %v1590, 96
    %v1593 = vpop.permute.xlu0 %1592
    %s1595 = scalar_lea.vmem [#allocation3], 48
    %1596 = vst.msk [vmem:[%s1595] sm:$0xff] %vm201, %v1593
    %s1597 = scalar_lea.vmem [#allocation2], 56
    %v1598 = vld [vmem:[%s1597] sm:$0xff]
    %1599 = vmatprep.subr.bf16.mxu0 0
    %1600 = vmatpush1.bf16.msra.mxu0 0
    %1601 = vmatprep.subr.bf16.mxu0 0
    %1602 = vmatpush1.bf16.msra.mxu0 0
    %1603 = vmatprep.subr.bf16.mxu0 0
    %1604 = vmatpush1.bf16.msra.mxu0 0
    %1605 = vmatprep.subr.bf16.mxu0 0
    %1606 = vmatpush1.bf16.msra.mxu0 0
    %1607 = vmatprep.subr.bf16.mxu0 0
    %1608 = vmatpush1.bf16.msra.mxu0 0
    %1609 = vmatprep.subr.bf16.mxu0 0
    %1610 = vmatpush1.bf16.msra.mxu0 0
    %1611 = vmatprep.subr.bf16.mxu0 0
    %1612 = vmatpush1.bf16.msra.mxu0 %v198
    %1613 = vmatprep.subr.bf16.mxu0 0
    %1614 = vmatpush1.bf16.msra.mxu0 %v197
    %1615 = vmatprep.subr.bf16.mxu0 0
    %1616 = vmatpush2.bf16.msra.mxu0 0
    %1617 = vmatprep.subr.bf16.mxu0 0
    %1618 = vmatpush2.bf16.msra.mxu0 0
    %1619 = vmatprep.subr.bf16.mxu0 0
    %1620 = vmatpush2.bf16.msra.mxu0 0
    %1621 = vmatprep.subr.bf16.mxu0 0
    %1622 = vmatpush2.bf16.msra.mxu0 0
    %1623 = vmatprep.subr.bf16.mxu0 0
    %1624 = vmatpush2.bf16.msra.mxu0 0
    %1625 = vmatprep.subr.bf16.mxu0 0
    %1626 = vmatpush2.bf16.msra.mxu0 0
    %1627 = vmatprep.subr.bf16.mxu0 0
    %1628 = vmatpush2.bf16.msra.mxu0 0
    %1629 = vmatprep.subr.bf16.mxu0 0
    %1630 = vmatpush2.bf16.msra.mxu0 0
    %1631 = vmatprep.mubr.bf16.mxu0 0
    %1632 = vmatmul.mubr.bf16.gmra.mxu0 %v1475
    %v1633 = vpop.f32.mrf.mxu0
    %v1634 = vadd.f32 0.0, %v1633
    %v1635 = vpop.f32.mrf.mxu0
    %v1636 = vpop.f32.mrf.mxu0
    %v1637 = vpop.f32.mrf.mxu0
    %1638 = vdwg.mxu0
    %v1639 = vadd.f32 %v1598, %v1634
    %v1640 = vxor.u32 %v1639, 2147483648
    %v1641 = vmul.f32 %v1640, 1.442695
    %v1642 = vpow.pop %v1641
    %v1643 = vadd.f32 %v1642, 1.0
    %v1644 = vrcp.pop %v1643
    %v1645 = vmul.f32 1.0, %v1644
    %v1646 = vadd.f32 %v1634, %v253
    %1648 = vrot.lane.b32.xlu0 %v1646, 64
    %v1649 = vpop.permute.xlu0 %1648
    %v1651 = vmul.f32 %v1645, %v1649
    %1653 = vrot.lane.b32.xlu0 %v1651, 64
    %v1654 = vpop.permute.xlu0 %1653
    %v1656 = vadd.f32 %v1598, %v1654
    %v1657 = vtanh.pop %v1656
    %v1658 = vsub.f32 1.0, %v1645
    %1660 = vrot.lane.b32.xlu0 %v1657, 96
    %v1661 = vpop.permute.xlu0 %1660
    %v1663 = vmul.f32 %v1658, %v1661
    %v1664 = vmul.f32 %v1645, %v1469
    %v1665 = vadd.f32 %v1663, %v1664
    %v1666 = vpack.c.bf16 %v1665, %v1665
    %1668 = vrot.lane.b32.xlu0 %v1666, 96
    %v1669 = vpop.permute.xlu0 %1668
    %v1671 = vsel %vm201, %v1669, 0
    %1673 = vmatprep.subr.bf16.mxu0 0
    %1674 = vmatpush1.bf16.msra.mxu0 0
    %1675 = vmatprep.subr.bf16.mxu0 0
    %1676 = vmatpush1.bf16.msra.mxu0 0
    %1677 = vmatprep.subr.bf16.mxu0 0
    %1678 = vmatpush1.bf16.msra.mxu0 0
    %1679 = vmatprep.subr.bf16.mxu0 0
    %1680 = vmatpush1.bf16.msra.mxu0 0
    %1681 = vmatprep.subr.bf16.mxu0 0
    %1682 = vmatpush1.bf16.msra.mxu0 0
    %1683 = vmatprep.subr.bf16.mxu0 0
    %1684 = vmatpush1.bf16.msra.mxu0 0
    %1685 = vmatprep.subr.bf16.mxu0 0
    %1686 = vmatpush1.bf16.msra.mxu0 %v288
    %1687 = vmatprep.subr.bf16.mxu0 0
    %1688 = vmatpush1.bf16.msra.mxu0 %v287
    %1689 = vmatprep.subr.bf16.mxu0 0
    %1690 = vmatpush2.bf16.msra.mxu0 0
    %1691 = vmatprep.subr.bf16.mxu0 0
    %1692 = vmatpush2.bf16.msra.mxu0 0
    %1693 = vmatprep.subr.bf16.mxu0 0
    %1694 = vmatpush2.bf16.msra.mxu0 0
    %1695 = vmatprep.subr.bf16.mxu0 0
    %1696 = vmatpush2.bf16.msra.mxu0 0
    %1697 = vmatprep.subr.bf16.mxu0 0
    %1698 = vmatpush2.bf16.msra.mxu0 0
    %1699 = vmatprep.subr.bf16.mxu0 0
    %1700 = vmatpush2.bf16.msra.mxu0 0
    %1701 = vmatprep.subr.bf16.mxu0 0
    %1702 = vmatpush2.bf16.msra.mxu0 0
    %1703 = vmatprep.subr.bf16.mxu0 0
    %1704 = vmatpush2.bf16.msra.mxu0 0
    %1705 = vmatprep.mubr.bf16.mxu0 0
    %1706 = vmatmul.mubr.bf16.gmra.mxu0 %v1671
    %v1707 = vpop.f32.mrf.mxu0
    %v1708 = vadd.f32 %v174, %v1707
    %v1709 = vpop.f32.mrf.mxu0
    %v1710 = vpop.f32.mrf.mxu0
    %v1711 = vpop.f32.mrf.mxu0
    %1712 = vdwg.mxu0
    %v1713 = vpack.c.bf16 %v1590, %v1590
    %1715 = vrot.lane.b32.xlu0 %v1713, 96
    %v1716 = vpop.permute.xlu0 %1715
    %v1718 = vsel %vm201, %v1716, 0
    %1720 = vmatprep.subr.bf16.mxu0 0
    %1721 = vmatpush1.bf16.msra.mxu0 0
    %1722 = vmatprep.subr.bf16.mxu0 0
    %1723 = vmatpush1.bf16.msra.mxu0 0
    %1724 = vmatprep.subr.bf16.mxu0 0
    %1725 = vmatpush1.bf16.msra.mxu0 0
    %1726 = vmatprep.subr.bf16.mxu0 0
    %1727 = vmatpush1.bf16.msra.mxu0 0
    %1728 = vmatprep.subr.bf16.mxu0 0
    %1729 = vmatpush1.bf16.msra.mxu0 0
    %1730 = vmatprep.subr.bf16.mxu0 0
    %1731 = vmatpush1.bf16.msra.mxu0 0
    %1732 = vmatprep.subr.bf16.mxu0 0
    %1733 = vmatpush1.bf16.msra.mxu0 %v343
    %1734 = vmatprep.subr.bf16.mxu0 0
    %1735 = vmatpush1.bf16.msra.mxu0 %v342
    %1736 = vmatprep.subr.bf16.mxu0 0
    %1737 = vmatpush2.bf16.msra.mxu0 0
    %1738 = vmatprep.subr.bf16.mxu0 0
    %1739 = vmatpush2.bf16.msra.mxu0 0
    %1740 = vmatprep.subr.bf16.mxu0 0
    %1741 = vmatpush2.bf16.msra.mxu0 0
    %1742 = vmatprep.subr.bf16.mxu0 0
    %1743 = vmatpush2.bf16.msra.mxu0 0
    %1744 = vmatprep.subr.bf16.mxu0 0
    %1745 = vmatpush2.bf16.msra.mxu0 0
    %1746 = vmatprep.subr.bf16.mxu0 0
    %1747 = vmatpush2.bf16.msra.mxu0 0
    %1748 = vmatprep.subr.bf16.mxu0 0
    %1749 = vmatpush2.bf16.msra.mxu0 0
    %1750 = vmatprep.subr.bf16.mxu0 0
    %1751 = vmatpush2.bf16.msra.mxu0 0
    %1752 = vmatprep.mubr.bf16.mxu0 0
    %1753 = vmatmul.mubr.bf16.gmra.mxu0 %v1718
    %v1754 = vpop.f32.mrf.mxu0
    %v1755 = vadd.f32 0.0, %v1754
    %v1756 = vpop.f32.mrf.mxu0
    %v1757 = vpop.f32.mrf.mxu0
    %v1758 = vpop.f32.mrf.mxu0
    %1759 = vdwg.mxu0
    %v1760 = vadd.f32 %v1708, %v1755
    %v1761 = vxor.u32 %v1760, 2147483648
    %v1762 = vmul.f32 %v1761, 1.442695
    %v1763 = vpow.pop %v1762
    %v1764 = vadd.f32 %v1763, 1.0
    %v1765 = vrcp.pop %v1764
    %v1766 = vmul.f32 1.0, %v1765
    %v1767 = vadd.f32 %v1755, %v394
    %1769 = vrot.lane.b32.xlu0 %v1767, 64
    %v1770 = vpop.permute.xlu0 %1769
    %v1772 = vmul.f32 %v1766, %v1770
    %1774 = vrot.lane.b32.xlu0 %v1772, 64
    %v1775 = vpop.permute.xlu0 %1774
    %v1777 = vadd.f32 %v1708, %v1775
    %v1778 = vtanh.pop %v1777
    %v1779 = vsub.f32 1.0, %v1766
    %1781 = vrot.lane.b32.xlu0 %v1778, 96
    %v1782 = vpop.permute.xlu0 %1781
    %v1784 = vmul.f32 %v1779, %v1782
    %v1785 = vmul.f32 %v1766, %v1590
    %v1786 = vadd.f32 %v1784, %v1785
    %1788 = vrot.lane.b32.xlu0 %v1786, 96
    %v1789 = vpop.permute.xlu0 %1788
    %s1791 = scalar_lea.vmem [#allocation3], 56
    %1792 = vst.msk [vmem:[%s1791] sm:$0xff] %vm201, %v1789
    %1794 = vrot.lane.b32.xlu0 %v1665, 96
    %v1795 = vpop.permute.xlu0 %1794
    %1797 = vst.msk [vmem:[#allocation6] sm:$0xff] %vm201, %v1795
    %s1798 = scalar_lea.vmem [#allocation6], 8
    %1799 = vst.msk [vmem:[%s1798] sm:$0xff] %vm201, %v1789
    %v1800 = vld [vmem:[#allocation3] sm:$0xff]
    %v1801 = vld [vmem:[#allocation3 + $0x8] sm:$0xff]
    %v1802 = vld [vmem:[#allocation3 + $0x10] sm:$0xff]
    %v1803 = vld [vmem:[#allocation3 + $0x18] sm:$0xff]
    %v1804 = vld [vmem:[#allocation3 + $0x20] sm:$0xff]
    %v1805 = vld [vmem:[#allocation3 + $0x28] sm:$0xff]
    %v1806 = vld [vmem:[#allocation3 + $0x30] sm:$0xff]
    %v1807 = vld [vmem:[#allocation3 + $0x38] sm:$0xff]
    %v1808 = vpack.c.bf16 %v1801, %v1800
    %v1809 = vpack.c.bf16 %v1803, %v1802
    %v1810 = vpack.c.bf16 %v1805, %v1804
    %v1811 = vpack.c.bf16 %v1807, %v1806
    %v1812 = vld [vmem:[%s9] sm:$0xf]
    %v1813 = vld [vmem:[%s9 + $0x4] sm:$0xf]
    %v1814 = vld [vmem:[%s9 + $0x8] sm:$0xf]
    %v1815 = vld [vmem:[%s9 + $0xc] sm:$0xf]
    %v1816 = vld [vmem:[%s10] sm:$0x1]
    %v1818 = vlaneseq
    %v1819 = vshrl.u32 %v1818, 7
    %v1820 = vsub.s32 0, %v1819
    %v1821 = vrot.slane %v1816, %v1820
    %v1827 = vunpack.c.l.b16 %v1812
    %v1828 = vunpack.c.l.b16 %v1813
    %v1829 = vunpack.c.l.b16 %v1814
    %v1830 = vunpack.c.l.b16 %v1815
    %v1831 = vpack.c.b16 %v1828, %v1827
    %v1832 = vpack.c.b16 %v1830, %v1829
    %v1836 = vsel %vm201, %v1808, 0
    %v1839 = vsel %vm201, %v1809, 0
    %v1842 = vsel %vm201, %v1810, 0
    %v1845 = vsel %vm201, %v1811, 0
    %1847 = vmatprep.subr.bf16.mxu0 0
    %1848 = vmatpush1.bf16.msra.mxu0 0
    %1849 = vmatprep.subr.bf16.mxu0 0
    %1850 = vmatpush1.bf16.msra.mxu0 0
    %1851 = vmatprep.subr.bf16.mxu0 0
    %1852 = vmatpush1.bf16.msra.mxu0 0
    %1853 = vmatprep.subr.bf16.mxu0 0
    %1854 = vmatpush1.bf16.msra.mxu0 0
    %1855 = vmatprep.subr.bf16.mxu0 0
    %1856 = vmatpush1.bf16.msra.mxu0 0
    %1857 = vmatprep.subr.bf16.mxu0 0
    %1858 = vmatpush1.bf16.msra.mxu0 0
    %1859 = vmatprep.subr.bf16.mxu0 0
    %1860 = vmatpush1.bf16.msra.mxu0 %v1832
    %1861 = vmatprep.subr.bf16.mxu0 0
    %1862 = vmatpush1.bf16.msra.mxu0 %v1831
    %1863 = vmatprep.subr.bf16.mxu0 0
    %1864 = vmatpush2.bf16.msra.mxu0 0
    %1865 = vmatprep.subr.bf16.mxu0 0
    %1866 = vmatpush2.bf16.msra.mxu0 0
    %1867 = vmatprep.subr.bf16.mxu0 0
    %1868 = vmatpush2.bf16.msra.mxu0 0
    %1869 = vmatprep.subr.bf16.mxu0 0
    %1870 = vmatpush2.bf16.msra.mxu0 0
    %1871 = vmatprep.subr.bf16.mxu0 0
    %1872 = vmatpush2.bf16.msra.mxu0 0
    %1873 = vmatprep.subr.bf16.mxu0 0
    %1874 = vmatpush2.bf16.msra.mxu0 0
    %1875 = vmatprep.subr.bf16.mxu0 0
    %1876 = vmatpush2.bf16.msra.mxu0 0
    %1877 = vmatprep.subr.bf16.mxu0 0
    %1878 = vmatpush2.bf16.msra.mxu0 0
    %1879 = vmatprep.mubr.bf16.mxu0 0
    %1880 = vmatmul.mubr.bf16.gmra.mxu0 %v1836
    %v1881 = vpop.f32.mrf.mxu0
    %v1882 = vadd.f32 %v1821, %v1881
    %v1883 = vpop.f32.mrf.mxu0
    %v1884 = vpop.f32.mrf.mxu0
    %v1885 = vadd.f32 %v1821, %v1884
    %v1886 = vpop.f32.mrf.mxu0
    %1887 = vmatprep.mubr.bf16.mxu0 0
    %1888 = vmatmul.mubr.bf16.gmra.mxu0 %v1839
    %v1889 = vpop.f32.mrf.mxu0
    %v1890 = vadd.f32 %v1821, %v1889
    %v1891 = vpop.f32.mrf.mxu0
    %v1892 = vpop.f32.mrf.mxu0
    %v1893 = vadd.f32 %v1821, %v1892
    %v1894 = vpop.f32.mrf.mxu0
    %1895 = vmatprep.mubr.bf16.mxu0 0
    %1896 = vmatmul.mubr.bf16.gmra.mxu0 %v1842
    %v1897 = vpop.f32.mrf.mxu0
    %v1898 = vadd.f32 %v1821, %v1897
    %v1899 = vpop.f32.mrf.mxu0
    %v1900 = vpop.f32.mrf.mxu0
    %v1901 = vadd.f32 %v1821, %v1900
    %v1902 = vpop.f32.mrf.mxu0
    %1903 = vmatprep.mubr.bf16.mxu0 0
    %1904 = vmatmul.mubr.bf16.gmra.mxu0 %v1845
    %v1905 = vpop.f32.mrf.mxu0
    %v1906 = vadd.f32 %v1821, %v1905
    %v1907 = vpop.f32.mrf.mxu0
    %v1908 = vpop.f32.mrf.mxu0
    %v1909 = vadd.f32 %v1821, %v1908
    %v1910 = vpop.f32.mrf.mxu0
    %1911 = vdwg.mxu0
    %v1912 = vlaneseq
    %v1913 = vand.u32 %v1912, 127
    %vm1914 = vcmp.ge.s32.totalorder %v1913, 16
    %vm1915 = vcmp.lt.s32.totalorder %v1913, 20
    %vm1916 = vmand %vm1914, %vm1915
    %v1917 = vtanh.pop %v1882
    %v1918 = vtanh.pop %v1885
    %v1919 = vtanh.pop %v1890
    %v1920 = vtanh.pop %v1893
    %v1921 = vtanh.pop %v1898
    %v1922 = vtanh.pop %v1901
    %v1923 = vtanh.pop %v1906
    %v1924 = vtanh.pop %v1909
    %v1925 = vsel %vm1916, %v1917, %v1882
    %v1926 = vsel %vm1916, %v1918, %v1885
    %v1927 = vsel %vm1916, %v1919, %v1890
    %v1928 = vsel %vm1916, %v1920, %v1893
    %v1929 = vsel %vm1916, %v1921, %v1898
    %v1930 = vsel %vm1916, %v1922, %v1901
    %v1931 = vsel %vm1916, %v1923, %v1906
    %v1932 = vsel %vm1916, %v1924, %v1909
    %1933 = vst [vmem:[#allocation4] sm:$0xff] %v1925
    %1934 = vst [vmem:[#allocation4 + $0x8] sm:$0xff] %v1926
    %1935 = vst [vmem:[#allocation4 + $0x10] sm:$0xff] %v1927
    %1936 = vst [vmem:[#allocation4 + $0x18] sm:$0xff] %v1928
    %1937 = vst [vmem:[#allocation4 + $0x20] sm:$0xff] %v1929
    %1938 = vst [vmem:[#allocation4 + $0x28] sm:$0xff] %v1930
    %1939 = vst [vmem:[#allocation4 + $0x30] sm:$0xff] %v1931
    %1940 = vst [vmem:[#allocation4 + $0x38] sm:$0xff] %v1932
    // Predicated region
    $region46: #{tpu_custom_call.1} parent=1 // pred_check
      _
    $region47: #{tpu_custom_call.1} parent=1 // pred_check_branch
      %1942 = sbr.rel (0) target = $region49
    $region48: #{tpu_custom_call.1} parent=1 // pred_region
      %s1944 = ssub.s32 1024, 1024
      %1945 = vsyncadd [#allocation5], %s1944
      %s1946 = sshll.u32 [#allocation4], 4
      %s1947 = int_to_ptr.vmem [resolvable:$true] %s1946
      %1952 = dma.vmem_to_hbm [thread:$0]  %s1947, 1024, %s11, [#allocation5], 128, 128, 8
    $region49: #{tpu_custom_call.1} parent=1 // pred_fallthru
      _
    // Predicated region
    $region50: #{tpu_custom_call.1} parent=1 // pred_check
      _
    $region51: #{tpu_custom_call.1} parent=1 // pred_check_branch
      %1954 = sbr.rel (0) target = $region53
    $region52: #{tpu_custom_call.1} parent=1 // pred_region
      %s1956 = ssub.s32 256, 256
      %1957 = vsyncadd [#allocation7], %s1956
      %s1958 = sshll.u32 [#allocation6], 4
      %s1959 = int_to_ptr.vmem [resolvable:$true] %s1958
      %1964 = dma.vmem_to_hbm [thread:$0]  %s1959, 256, %s12, [#allocation7], 128, 128, 8
    $region53: #{tpu_custom_call.1} parent=1 // pred_fallthru
      _
    // Predicated region
    $region54: #{tpu_custom_call.1} parent=1 // pred_check
      _
    $region55: #{tpu_custom_call.1} parent=1 // pred_check_branch
      %1966 = sbr.rel (0) target = $region57
    $region56: #{tpu_custom_call.1} parent=1 // pred_region
      %1967 = dma.done [#allocation5], 1024
    $region57: #{tpu_custom_call.1} parent=1 // pred_fallthru
      _
    // Predicated region
    $region58: #{tpu_custom_call.1} parent=1 // pred_check
      _
    $region59: #{tpu_custom_call.1} parent=1 // pred_check_branch
      %1969 = sbr.rel (0) target = $region61
    $region60: #{tpu_custom_call.1} parent=1 // pred_region
      %1970 = dma.done [#allocation7], 256
    $region61: #{tpu_custom_call.1} parent=1 // pred_fallthru
      _
    %1971 = vsyncpa [#allocation5], 1
    %1972 = vsyncpa [#allocation7], 1

</llo_original>
